<compile_context>
chip_gen: v5e
topology: v5e:2x2
jax: 0.10.0
libtpu: 0.0.40
codegen_flags: <defaults>
</compile_context>

<pallas_src>
import numpy as np

import jax
import jax.numpy as jnp
from jax import lax
from jax.experimental import pallas as pl
from jax.experimental.pallas import tpu as pltpu


# --------------------------- weight packing helpers ---------------------------

def _pad_rows(m, rows):
    return jnp.pad(m, ((0, rows - m.shape[0]), (0, 0)))


def _pack_lanes(named):
    """Concatenate 2-D arrays (same row count) along lanes.

    Each segment is padded to a multiple of 128 lanes so in-kernel slices are
    lane-aligned.  Returns (slab, {name: (offset, width)}).
    """
    pieces, offs, off = [], {}, 0
    for name, m in named:
        w = int(m.shape[1])
        wpad = -(-w // 128) * 128
        pieces.append(jnp.pad(m, ((0, 0), (0, wpad - w))))
        offs[name] = (off, w)
        off += wpad
    return jnp.concatenate(pieces, axis=1), offs


# ----------------------- one-time weight preprocessing -----------------------

def prepare_astgcn(params):
    """Fold all convs / per-axis contractions into structured matmul weights
    and pack them into a few lane-aligned VMEM slabs (amortized across calls).

    Assumes all submodules share the same block structure / shapes (true for
    the driver below).
    """
    subs = params['submodules']
    S = len(subs)
    n_blocks = len(subs[0]['blocks'])
    P = params['W_mix'].shape[-1]

    levels = []
    for li in range(n_blocks):
        p0 = subs[0]['blocks'][li]
        F, G = p0['Wg'].shape
        T = p0['b_e'].shape[0]
        V = p0['b_s'].shape[0]
        Co = p0['tc_b'].shape[0]
        stride = subs[0]['strides'][li]
        T_out = (T - 1) // stride + 1
        final = (li == n_blocks - 1)

        # selection matrices for the [1,3] temporal conv / the strided 1x1 conv
        sel_tc = np.zeros((T, 3, T_out), np.float32)
        for k in range(3):
            for to in range(T_out):
                t = to * stride - 1 + k
                if 0 <= t < T:
                    sel_tc[t, k, to] = 1.0
        sel_res = np.zeros((T, T_out), np.float32)
        for to in range(T_out):
            sel_res[to * stride, to] = 1.0
        sel_tc = jnp.asarray(sel_tc)
        sel_res = jnp.asarray(sel_res)
        eye_v = jnp.eye(V, dtype=jnp.float32)
        eye_t = jnp.eye(T, dtype=jnp.float32)

        per_sub = {'v': [], 'vf': [], 'ft': [], 'gt': [], 'row': []}
        offs = {}
        for si, sp in enumerate(subs):
            p = sp['blocks'][li]
            m1 = (p['U1'][:, None, None] * p['U2'][None, :, :]).reshape(V * F, V)
            k3u = jnp.kron(eye_v, p['U3'].reshape(1, F))                 # (V, V*F)
            w2e = jnp.tile(p['W2'], (V, 1))                              # (V*F, T)
            k3w = jnp.kron(eye_v, p['W3'].reshape(1, F))                 # (V, V*F)
            wgbig = jnp.kron(p['Wg'], eye_t)                             # (F*T, G*T)
            wtcbig = jnp.einsum('tko,cgk->gtoc', sel_tc,
                                p['tc_w'][:, :, 0, :]).reshape(G * T, T_out * Co)
            wresbig = jnp.einsum('to,cf->ftoc', sel_res,
                                 p['rc_w'][:, :, 0, 0]).reshape(F * T, T_out * Co)
            bias = (jnp.tile(p['tc_b'], T_out)
                    + jnp.tile(p['rc_b'], T_out)).reshape(1, T_out * Co)
            lng = jnp.tile(p['ln_g'], T_out).reshape(1, T_out * Co)
            lnb = jnp.tile(p['ln_b'], T_out).reshape(1, T_out * Co)

            v_named = [('k3u', k3u), ('k3w', k3w), ('b_s', p['b_s']),
                       ('V_s', p['V_s']), ('A', sp['A']),
                       ('b_e', _pad_rows(p['b_e'], V)),
                       ('V_e', _pad_rows(p['V_e'], V))]
            vf_named = [('m1', m1), ('w2e', w2e)]
            ft_named = [('wg', wgbig), ('wres', wresbig)]
            gt_named = [('wtc', wtcbig)]
            row_named = [('w1', p['W1'].reshape(1, T)), ('bias', bias),
                         ('lng', lng), ('lnb', lnb)]
            if final:
                fw = sp['final_w'][:, :, 0, :]                           # (P, T_out, G)
                wf = jnp.pad(jnp.transpose(fw, (1, 2, 0)),
                             ((0, 0), (0, Co - fw.shape[2]), (0, 0))
                             ).reshape(T_out * Co, P)
                gt_named.append(('wf', wf))
                row_named.append(('bfin', sp['final_b'].reshape(1, P)))
                v_named.append(('wmix', params['W_mix'][si].astype(jnp.float32)))

            for key, named in (('v', v_named), ('vf', vf_named), ('ft', ft_named),
                               ('gt', gt_named), ('row', row_named)):
                slab, offs[key] = _pack_lanes(named)   # offsets identical per si
                per_sub[key].append(slab)

        slabs = [jnp.stack(per_sub[k]) for k in ('v', 'vf', 'ft', 'gt', 'row')]
        consts = [
            jnp.kron(eye_v, jnp.ones((1, F), jnp.float32)),              # Mv (V, V*F)
            jnp.kron(jnp.eye(T_out, dtype=jnp.float32),
                     jnp.ones((Co, Co), jnp.float32) / Co),              # Mmean
        ]
        levels.append(dict(
            slabs=slabs, consts=consts,
            meta=dict(V=V, F=F, T=T, T_out=T_out, Co=Co, G=G, final=final,
                      offs=offs)))
    return dict(levels=levels, S=S, P=P)


# --------------------------------- the kernel ---------------------------------

_REFS_PER_LEVEL = 7   # slab_v, slab_vf, slab_ft, slab_gt, slab_row, Mv, Mmean


def _make_model_kernel(metas, B):
    """Whole-model body for one submodule grid step: all blocks, final conv,
    W_mix scaling and accumulation over submodules, batch unrolled inside."""

    def kernel(xf_ref, xv_ref, *rest):
        out_ref = rest[-1]
        lvl_refs = rest[:-1]

        @pl.when(pl.program_id(0) == 0)
        def _():
            out_ref[...] = jnp.zeros_like(out_ref)

        def seg(ref, offs, name, rows=None):
            off, w = offs[name]
            if rows is None:
                return ref[0, :, off:off + w]
            return ref[0, 0:rows, off:off + w]

        # Static unroll over batch: the B independent small-matmul chains get
        # interleaved by the scheduler to fill the MXU pipeline.
        for b in range(B):
            xf = xf_ref[b]                        # (V*F, T): x[v,f,t] at [v*F+f, t]
            xv = xv_ref[b]                        # (V, F*T): x[v,f,t] at [v, f*T+t]
            for li, meta in enumerate(metas):
                sv, svf, sft, sgt, srow, mv_ref, mm_ref = (
                    lvl_refs[li * _REFS_PER_LEVEL:(li + 1) * _REFS_PER_LEVEL])
                T, V, Co, T_out = meta['T'], meta['V'], meta['Co'], meta['T_out']
                ov, ovf, oft = meta['offs']['v'], meta['offs']['vf'], meta['offs']['ft']
                ogt, orow = meta['offs']['gt'], meta['offs']['row']

                # ---- temporal attention ----
                lhs = lax.dot_general(             # transposed contraction on xf
                    xf, seg(svf, ovf, 'm1'), (((0,), (0,)), ((), ())),
                    preferred_element_type=jnp.float32)                    # (T, V)
                rhs = jnp.dot(seg(sv, ov, 'k3u'), xf,
                              preferred_element_type=jnp.float32)          # (V, T)
                prod = jnp.dot(lhs, rhs, preferred_element_type=jnp.float32)
                sig = pl.reciprocal(
                    1.0 + jnp.exp(-(prod + seg(sv, ov, 'b_e', rows=T))), approx=True)
                e = jnp.dot(seg(sv, ov, 'V_e', rows=T), sig,
                            preferred_element_type=jnp.float32)
                e = e - jnp.max(e, axis=0, keepdims=True)  # torch softmax over dim=1
                ee = jnp.exp(e)
                t_at = ee * pl.reciprocal(jnp.sum(ee, axis=0, keepdims=True),
                                          approx=True)                     # (T, T)

                # ---- apply temporal attention ----
                x_tat = jnp.dot(xf, t_at, preferred_element_type=jnp.float32)

                # ---- spatial attention (on x_tat) ----
                q = jnp.sum(x_tat * seg(srow, orow, 'w1'), axis=1, keepdims=True)
                s_lhs = jnp.dot(mv_ref[...], q * seg(svf, ovf, 'w2e'),
                                preferred_element_type=jnp.float32)        # (V, T)
                s_rhs = jnp.dot(seg(sv, ov, 'k3w'), x_tat,
                                preferred_element_type=jnp.float32)        # (V, T)
                s_prod = lax.dot_general(s_lhs, s_rhs, (((1,), (1,)), ((), ())),
                                         preferred_element_type=jnp.float32)
                s_sig = pl.reciprocal(
                    1.0 + jnp.exp(-(s_prod + seg(sv, ov, 'b_s'))), approx=True)
                s_e = jnp.dot(seg(sv, ov, 'V_s'), s_sig,
                              preferred_element_type=jnp.float32)
                s_e = s_e - jnp.max(s_e, axis=0, keepdims=True)
                s_ee = jnp.exp(s_e)
                s_at = s_ee * pl.reciprocal(jnp.sum(s_ee, axis=0, keepdims=True),
                                            approx=True)                   # (V, V)

                # ---- GCN (uses the ORIGINAL x of this block, as in torch) ----
                mixed = jnp.dot(s_at * seg(sv, ov, 'A'), xv,
                                preferred_element_type=jnp.float32)        # (V, F*T)
                gcn = jnp.maximum(
                    jnp.dot(mixed, seg(sft, oft, 'wg'),
                            preferred_element_type=jnp.float32), 0.0)      # (V, G*T)

                # ---- [1,3] temporal conv + strided 1x1 residual conv + relu ----
                z = (jnp.dot(gcn, seg(sgt, ogt, 'wtc'),
                             preferred_element_type=jnp.float32)
                     + jnp.dot(xv, seg(sft, oft, 'wres'),
                               preferred_element_type=jnp.float32)
                     + seg(srow, orow, 'bias'))
                z = jnp.maximum(z, 0.0)                                    # (V, T_out*Co)

                # ---- LayerNorm over Co (block means via kron(I, 1/Co) matmul) ----
                mu = jnp.dot(z, mm_ref[...], preferred_element_type=jnp.float32)
                d = z - mu
                var = jnp.dot(d * d, mm_ref[...], preferred_element_type=jnp.float32)
                zn = (d * lax.rsqrt(var + 1e-5) * seg(srow, orow, 'lng')
                      + seg(srow, orow, 'lnb'))                            # (V, T_out*Co)

                if meta['final']:
                    # final conv + bias, W_mix scaling and submodule accumulation
                    pred = (jnp.dot(zn, seg(sgt, ogt, 'wf'),
                                    preferred_element_type=jnp.float32)
                            + seg(srow, orow, 'bfin'))                     # (V, P)
                    out_ref[b] += pred * seg(sv, ov, 'wmix')
                else:
                    # next block's input layouts, derived in VMEM (no HBM trip)
                    a_vct = jnp.transpose(zn.reshape(V, T_out, Co), (0, 2, 1))
                    xf = a_vct.reshape(V * Co, T_out)
                    xv = a_vct.reshape(V, Co * T_out)

    return kernel


# -------------------------------- forward pass --------------------------------

def astgcn_pallas(X, prepared):
    """X: (B, V, T, F) as in torch ASTGCN.forward; returns (B*V, P)."""
    B, V = X.shape[0], X.shape[1]
    x = jnp.swapaxes(X, 2, 3)                      # (B, V, F, T)
    F, T = x.shape[2], x.shape[3]
    xf = x.reshape(B, V * F, T)                    # two aliased views, read once
    xv = x.reshape(B, V, F * T)

    levels, S, P = prepared['levels'], prepared['S'], prepared['P']

    args = [xf, xv]
    in_specs = [pl.BlockSpec(xf.shape, lambda s: (0, 0, 0)),
                pl.BlockSpec(xv.shape, lambda s: (0, 0, 0))]
    for lv in levels:
        for slab in lv['slabs']:                   # per-submodule weight slabs
            args.append(slab)
            in_specs.append(
                pl.BlockSpec((1,) + slab.shape[1:], lambda s: (s, 0, 0)))
        for c in lv['consts']:                     # shared constants
            args.append(c)
            in_specs.append(pl.BlockSpec(c.shape, lambda s: (0, 0)))

    out = pl.pallas_call(
        _make_model_kernel([lv['meta'] for lv in levels], B),
        grid=(S,),
        in_specs=in_specs,
        out_specs=pl.BlockSpec((B, V, P), lambda s: (0, 0, 0)),
        out_shape=jax.ShapeDtypeStruct((B, V, P), jnp.float32),
        compiler_params=pltpu.CompilerParams(
            # S is an accumulation axis over the resident output block.
            dimension_semantics=("arbitrary",)),
    )(*args)
    return out.reshape(B * V, P)


# --------------------- pure-JAX reference (torch semantics) ---------------------

def _ref_temporal_attention(x, p):
    lhs = jnp.matmul(jnp.matmul(jnp.transpose(x, (0, 3, 2, 1)), p['U1']), p['U2'])
    rhs = jnp.matmul(jnp.transpose(x, (0, 1, 3, 2)), p['U3'])
    E = jnp.matmul(p['V_e'], jax.nn.sigmoid(jnp.matmul(lhs, rhs) + p['b_e']))
    E = E - jnp.max(E, axis=1, keepdims=True)
    e = jnp.exp(E)
    return e / jnp.sum(e, axis=1, keepdims=True)


def _ref_spatial_attention(x, p):
    lhs = jnp.matmul(jnp.matmul(x, p['W1']), p['W2'])
    rhs = jnp.matmul(jnp.transpose(x, (0, 3, 1, 2)), p['W3'])
    S = jnp.matmul(p['V_s'], jax.nn.sigmoid(jnp.matmul(lhs, rhs) + p['b_s']))
    S = S - jnp.max(S, axis=1, keepdims=True)
    e = jnp.exp(S)
    return e / jnp.sum(e, axis=1, keepdims=True)


def _ref_block(x, p, A, stride):
    B, V, F, T = x.shape
    tAt = _ref_temporal_attention(x, p)
    x_TAt = jnp.matmul(x.reshape(B, -1, T), tAt).reshape(B, V, F, T)
    sAt = _ref_spatial_attention(x_TAt, p)
    g = jnp.matmul(jnp.matmul(sAt * A, jnp.transpose(x, (3, 0, 1, 2))), p['Wg'])
    g = jnp.transpose(jnp.maximum(g, 0.0), (1, 2, 3, 0))              # (B,V,G,T)
    tc = jax.lax.conv_general_dilated(
        jnp.transpose(g, (0, 2, 1, 3)), p['tc_w'], window_strides=(1, stride),
        padding=((0, 0), (1, 1)), dimension_numbers=('NCHW', 'OIHW', 'NCHW'))
    tc = jnp.transpose(tc + p['tc_b'][None, :, None, None], (0, 2, 1, 3))
    rc = jax.lax.conv_general_dilated(
        jnp.transpose(x, (0, 2, 1, 3)), p['rc_w'], window_strides=(1, stride),
        padding=((0, 0), (0, 0)), dimension_numbers=('NCHW', 'OIHW', 'NCHW'))
    rc = jnp.transpose(rc + p['rc_b'][None, :, None, None], (0, 2, 1, 3))
    z = jnp.transpose(jnp.maximum(tc + rc, 0.0), (0, 1, 3, 2))        # (B,V,T_out,Co)
    mu = jnp.mean(z, axis=-1, keepdims=True)
    var = jnp.mean(jnp.square(z - mu), axis=-1, keepdims=True)
    z = (z - mu) / jnp.sqrt(var + 1e-5) * p['ln_g'] + p['ln_b']
    return jnp.transpose(z, (0, 1, 3, 2))


def _ref_submodule(x, sp):
    for bp, stride in zip(sp['blocks'], sp['strides']):
        x = _ref_block(x, bp, sp['A'], stride)
    y = jax.lax.conv_general_dilated(
        jnp.transpose(x, (0, 3, 1, 2)), sp['final_w'], window_strides=(1, 1),
        padding=((0, 0), (0, 0)), dimension_numbers=('NCHW', 'OIHW', 'NCHW'))
    y = (y + sp['final_b'][None, :, None, None])[..., 0]
    return jnp.swapaxes(y, 1, 2)


def ref_astgcn(X, params):
    B, V = X.shape[0], X.shape[1]
    Xt = jnp.swapaxes(X, 2, 3)
    out = 0.0
    for sp, w in zip(params['submodules'], params['W_mix']):
        out = out + _ref_submodule(Xt, sp) * w
    return out.reshape(B * V, -1)


# ------------------------------------- setup -------------------------------------

def init_block_params(key, V, F, T, Co, G):
    ks = jax.random.split(key, 15)
    r = lambda k, s, sc: jax.random.normal(k, s, dtype=jnp.float32) * sc
    return dict(
        U1=r(ks[0], (V,), 0.3), U2=r(ks[1], (F, V), 0.3), U3=r(ks[2], (F,), 0.3),
        b_e=r(ks[3], (T, T), 0.3), V_e=r(ks[4], (T, T), 0.3),
        W1=r(ks[5], (T,), 0.3), W2=r(ks[6], (F, T), 0.3), W3=r(ks[7], (F,), 0.3),
        b_s=r(ks[8], (V, V), 0.3), V_s=r(ks[9], (V, V), 0.3),
        Wg=r(ks[10], (F, G), 0.2),
        tc_w=r(ks[11], (Co, G, 1, 3), 0.1), tc_b=r(ks[12], (Co,), 0.1),
        rc_w=r(ks[13], (Co, F, 1, 1), 0.1), rc_b=r(ks[14], (Co,), 0.1),
        ln_g=jnp.ones((Co,), jnp.float32), ln_b=jnp.zeros((Co,), jnp.float32),
    )


if __name__ == "__main__":
    B, V, T, F = 2, 16, 8, 4        # batch, vertices, timesteps, features
    Co, G, P = 16, 16, 4            # out_channels, gcn_filters, n_predictions
    S = 2                           # number of submodules
    stride = 1

    key = jax.random.PRNGKey(0)
    k_x, k_p = jax.random.split(key)
    X = jax.random.normal(k_x, (B, V, T, F), dtype=jnp.float32)

    submodules = []
    keys = jax.random.split(k_p, S + 1)
    for si in range(S):
        sk = jax.random.split(keys[si], 4)
        block_p = init_block_params(sk[0], V, F, T, Co, G)
        Tl = T // stride
        submodules.append(dict(
            blocks=[block_p],
            strides=[stride],
            A=jax.random.normal(sk[1], (V, V), dtype=jnp.float32) * 0.3,
            final_w=jax.random.normal(sk[2], (P, Tl, 1, G), dtype=jnp.float32) * 0.1,
            final_b=jax.random.normal(sk[3], (P,), dtype=jnp.float32) * 0.1,
        ))
    params = dict(
        submodules=submodules,
        W_mix=jax.random.normal(keys[S], (S, V, P), dtype=jnp.float32) * 0.3,
    )

    prepared = prepare_astgcn(params)               # one-time weight preprocessing
    out = jax.block_until_ready(astgcn_pallas(X, prepared))

    # Scoped float32 reference (no process-global precision side effect).
    with jax.default_matmul_precision("float32"):
        ref = jax.block_until_ready(ref_astgcn(X, params))

    assert out.shape == (B * V, P), out.shape
    max_err = float(jnp.max(jnp.abs(out - ref)))
    # Kernel runs default (single bf16 MXU pass) precision; tolerance covers it.
    if not (max_err < 5e-2):
        raise AssertionError(f"Pallas output mismatch vs reference: max_err={max_err}")
    print("KERNEL_OK")
</pallas_src>

<mosaic_0001>
module attributes {stable_mosaic.version = 11 : i64} {
  func.func @kernel(%arg0: i32, %arg1: memref<2x64x8xf32, #tpu.memory_space<vmem>>, %arg2: memref<2x16x32xf32, #tpu.memory_space<vmem>>, %arg3: memref<1x16x1024xf32, #tpu.memory_space<vmem>>, %arg4: memref<1x64x256xf32, #tpu.memory_space<vmem>>, %arg5: memref<1x32x256xf32, #tpu.memory_space<vmem>>, %arg6: memref<1x128x256xf32, #tpu.memory_space<vmem>>, %arg7: memref<1x1x640xf32, #tpu.memory_space<vmem>>, %arg8: memref<16x64xf32, #tpu.memory_space<vmem>>, %arg9: memref<128x128xf32, #tpu.memory_space<vmem>>, %arg10: memref<2x16x4xf32, #tpu.memory_space<vmem>>) attributes {dimension_semantics = [#tpu.dimension_semantics<arbitrary>], iteration_bounds = array<i64: 2>, scalar_prefetch = 0 : i64, scratch_operands = 0 : i64, tpu.core_type = #tpu.core_type<tc>, window_params = [{pipeline_mode = #tpu.pipeline_mode<synchronous>, transform_indices = @transform_0, window_bounds = array<i64: 2, 64, 8>}, {pipeline_mode = #tpu.pipeline_mode<synchronous>, transform_indices = @transform_1, window_bounds = array<i64: 2, 16, 32>}, {transform_indices = @transform_2, window_bounds = array<i64: 1, 16, 1024>}, {transform_indices = @transform_3, window_bounds = array<i64: 1, 64, 256>}, {transform_indices = @transform_4, window_bounds = array<i64: 1, 32, 256>}, {transform_indices = @transform_5, window_bounds = array<i64: 1, 128, 256>}, {transform_indices = @transform_6, window_bounds = array<i64: 1, 1, 640>}, {pipeline_mode = #tpu.pipeline_mode<synchronous>, transform_indices = @transform_7, window_bounds = array<i64: 16, 64>}, {pipeline_mode = #tpu.pipeline_mode<synchronous>, transform_indices = @transform_8, window_bounds = array<i64: 128, 128>}, {pipeline_mode = #tpu.pipeline_mode<synchronous>, transform_indices = @transform_9, window_bounds = array<i64: 2, 16, 4>}]} {
    %c0_i32 = arith.constant 0 : i32
    %0 = arith.cmpi eq, %arg0, %c0_i32 : i32
    %1 = arith.extui %0 : i1 to i32
    %c0_i32_0 = arith.constant 0 : i32
    %2 = arith.cmpi ne, %1, %c0_i32_0 : i32
    scf.if %2 {
      %cst_197 = arith.constant 0.000000e+00 : f32
      %259 = vector.broadcast %cst_197 : f32 to vector<2x16x4xf32>
      %c0_198 = arith.constant 0 : index
      %c0_199 = arith.constant 0 : index
      %c0_200 = arith.constant 0 : index
      %260 = vector.load %arg10[%c0_198, %c0_199, %c0_200] : memref<2x16x4xf32, #tpu.memory_space<vmem>>, vector<2x16x4xf32>
      tpu.vector_store %arg10[%c0_198, %c0_199, %c0_200], %259 {strides = array<i32>} : memref<2x16x4xf32, #tpu.memory_space<vmem>>, vector<2x16x4xf32>,
    } else {
    }
    %c0 = arith.constant 0 : index
    %c0_1 = arith.constant 0 : index
    %c0_2 = arith.constant 0 : index
    %3 = vector.load %arg1[%c0, %c0_1, %c0_2] : memref<2x64x8xf32, #tpu.memory_space<vmem>>, vector<1x64x8xf32>
    %4 = vector.shape_cast %3 : vector<1x64x8xf32> to vector<64x8xf32>
    %c0_3 = arith.constant 0 : index
    %c0_4 = arith.constant 0 : index
    %c0_5 = arith.constant 0 : index
    %5 = vector.load %arg2[%c0_3, %c0_4, %c0_5] : memref<2x16x32xf32, #tpu.memory_space<vmem>>, vector<1x16x32xf32>
    %6 = vector.shape_cast %5 : vector<1x16x32xf32> to vector<16x32xf32>
    %c0_6 = arith.constant 0 : index
    %c0_7 = arith.constant 0 : index
    %c0_8 = arith.constant 0 : index
    %7 = vector.load %arg4[%c0_6, %c0_7, %c0_8] : memref<1x64x256xf32, #tpu.memory_space<vmem>>, vector<1x64x16xf32>
    %8 = vector.shape_cast %7 : vector<1x64x16xf32> to vector<64x16xf32>
    %cst = arith.constant dense<0.000000e+00> : vector<8x16xf32>
    %9 = tpu.matmul %4, %8, %cst {dimension_numbers = #tpu.dot_dimension_numbers<[0], [0], [1], [1], [0, 1, 1, 1], [], []>} : vector<64x8xf32>, vector<64x16xf32>, vector<8x16xf32> -> vector<8x16xf32>
    %c0_9 = arith.constant 0 : index
    %c0_10 = arith.constant 0 : index
    %c0_11 = arith.constant 0 : index
    %10 = vector.load %arg3[%c0_9, %c0_10, %c0_11] : memref<1x16x1024xf32, #tpu.memory_space<vmem>>, vector<1x16x64xf32>
    %11 = vector.shape_cast %10 : vector<1x16x64xf32> to vector<16x64xf32>
    %cst_12 = arith.constant dense<0.000000e+00> : vector<16x8xf32>
    %12 = tpu.matmul %11, %4, %cst_12 {dimension_numbers = #tpu.dot_dimension_numbers<[1], [0], [0], [1], [0, 0, 1, 1], [], []>} : vector<16x64xf32>, vector<64x8xf32>, vector<16x8xf32> -> vector<16x8xf32>
    %cst_13 = arith.constant dense<0.000000e+00> : vector<8x8xf32>
    %13 = tpu.matmul %9, %12, %cst_13 {dimension_numbers = #tpu.dot_dimension_numbers<[1], [0], [0], [1], [0, 0, 1, 1], [], []>} : vector<8x16xf32>, vector<16x8xf32>, vector<8x8xf32> -> vector<8x8xf32>
    %c0_14 = arith.constant 0 : index
    %c0_15 = arith.constant 0 : index
    %c640 = arith.constant 640 : index
    %14 = vector.load %arg3[%c0_14, %c0_15, %c640] : memref<1x16x1024xf32, #tpu.memory_space<vmem>>, vector<1x8x8xf32>
    %15 = vector.shape_cast %14 : vector<1x8x8xf32> to vector<8x8xf32>
    %16 = arith.addf %13, %15 : vector<8x8xf32>
    %cst_16 = arith.constant 0.000000e+00 : f32
    %17 = vector.broadcast %cst_16 : f32 to vector<8x8xf32>
    %18 = arith.subf %17, %16 : vector<8x8xf32>
    %19 = math.exp %18 : vector<8x8xf32>
    %cst_17 = arith.constant 1.000000e+00 : f32
    %20 = vector.broadcast %cst_17 : f32 to vector<8x8xf32>
    %21 = arith.addf %20, %19 : vector<8x8xf32>
    %22 = tpu.reciprocal %21 {approx = true} : vector<8x8xf32> -> vector<8x8xf32>
    %c0_18 = arith.constant 0 : index
    %c0_19 = arith.constant 0 : index
    %c768 = arith.constant 768 : index
    %23 = vector.load %arg3[%c0_18, %c0_19, %c768] : memref<1x16x1024xf32, #tpu.memory_space<vmem>>, vector<1x8x8xf32>
    %24 = vector.shape_cast %23 : vector<1x8x8xf32> to vector<8x8xf32>
    %cst_20 = arith.constant dense<0.000000e+00> : vector<8x8xf32>
    %25 = tpu.matmul %24, %22, %cst_20 {dimension_numbers = #tpu.dot_dimension_numbers<[1], [0], [0], [1], [0, 0, 1, 1], [], []>} : vector<8x8xf32>, vector<8x8xf32>, vector<8x8xf32> -> vector<8x8xf32>
    %cst_21 = arith.constant dense<0xFF800000> : vector<8xf32>
    %26 = vector.multi_reduction <maximumf>, %25, %cst_21 [0] : vector<8x8xf32> to vector<8xf32>
    %27 = vector.shape_cast %26 : vector<8xf32> to vector<1x8xf32>
    %28 = vector.broadcast %27 : vector<1x8xf32> to vector<8x8xf32>
    %29 = arith.subf %25, %28 : vector<8x8xf32>
    %30 = math.exp %29 : vector<8x8xf32>
    %cst_22 = arith.constant dense<0.000000e+00> : vector<8xf32>
    %31 = vector.multi_reduction <add>, %30, %cst_22 [0] : vector<8x8xf32> to vector<8xf32>
    %32 = vector.shape_cast %31 : vector<8xf32> to vector<1x8xf32>
    %33 = tpu.reciprocal %32 {approx = true} : vector<1x8xf32> -> vector<1x8xf32>
    %34 = vector.broadcast %33 : vector<1x8xf32> to vector<8x8xf32>
    %35 = arith.mulf %30, %34 : vector<8x8xf32>
    %cst_23 = arith.constant dense<0.000000e+00> : vector<64x8xf32>
    %36 = tpu.matmul %4, %35, %cst_23 {dimension_numbers = #tpu.dot_dimension_numbers<[1], [0], [0], [1], [0, 0, 1, 1], [], []>} : vector<64x8xf32>, vector<8x8xf32>, vector<64x8xf32> -> vector<64x8xf32>
    %c0_24 = arith.constant 0 : index
    %c0_25 = arith.constant 0 : index
    %c0_26 = arith.constant 0 : index
    %37 = vector.load %arg7[%c0_24, %c0_25, %c0_26] : memref<1x1x640xf32, #tpu.memory_space<vmem>>, vector<1x1x8xf32>
    %38 = vector.shape_cast %37 : vector<1x1x8xf32> to vector<1x8xf32>
    %39 = vector.broadcast %38 : vector<1x8xf32> to vector<64x8xf32>
    %40 = arith.mulf %36, %39 : vector<64x8xf32>
    %cst_27 = arith.constant dense<0.000000e+00> : vector<64xf32>
    %41 = vector.multi_reduction <add>, %40, %cst_27 [1] : vector<64x8xf32> to vector<64xf32>
    %42 = vector.shape_cast %41 : vector<64xf32> to vector<64x1xf32>
    %c0_28 = arith.constant 0 : index
    %c0_29 = arith.constant 0 : index
    %43 = vector.load %arg8[%c0_28, %c0_29] : memref<16x64xf32, #tpu.memory_space<vmem>>, vector<16x64xf32>
    %c0_30 = arith.constant 0 : index
    %c0_31 = arith.constant 0 : index
    %c128 = arith.constant 128 : index
    %44 = vector.load %arg4[%c0_30, %c0_31, %c128] : memref<1x64x256xf32, #tpu.memory_space<vmem>>, vector<1x64x8xf32>
    %45 = vector.shape_cast %44 : vector<1x64x8xf32> to vector<64x8xf32>
    %46 = vector.broadcast %42 : vector<64x1xf32> to vector<64x8xf32>
    %47 = arith.mulf %46, %45 : vector<64x8xf32>
    %cst_32 = arith.constant dense<0.000000e+00> : vector<16x8xf32>
    %48 = tpu.matmul %43, %47, %cst_32 {dimension_numbers = #tpu.dot_dimension_numbers<[1], [0], [0], [1], [0, 0, 1, 1], [], []>} : vector<16x64xf32>, vector<64x8xf32>, vector<16x8xf32> -> vector<16x8xf32>
    %c0_33 = arith.constant 0 : index
    %c0_34 = arith.constant 0 : index
    %c128_35 = arith.constant 128 : index
    %49 = vector.load %arg3[%c0_33, %c0_34, %c128_35] : memref<1x16x1024xf32, #tpu.memory_space<vmem>>, vector<1x16x64xf32>
    %50 = vector.shape_cast %49 : vector<1x16x64xf32> to vector<16x64xf32>
    %cst_36 = arith.constant dense<0.000000e+00> : vector<16x8xf32>
    %51 = tpu.matmul %50, %36, %cst_36 {dimension_numbers = #tpu.dot_dimension_numbers<[1], [0], [0], [1], [0, 0, 1, 1], [], []>} : vector<16x64xf32>, vector<64x8xf32>, vector<16x8xf32> -> vector<16x8xf32>
    %cst_37 = arith.constant dense<0.000000e+00> : vector<16x16xf32>
    %52 = tpu.matmul %48, %51, %cst_37 {dimension_numbers = #tpu.dot_dimension_numbers<[1], [1], [0], [0], [0, 0, 1, 0], [], []>} : vector<16x8xf32>, vector<16x8xf32>, vector<16x16xf32> -> vector<16x16xf32>
    %c0_38 = arith.constant 0 : index
    %c0_39 = arith.constant 0 : index
    %c256 = arith.constant 256 : index
    %53 = vector.load %arg3[%c0_38, %c0_39, %c256] : memref<1x16x1024xf32, #tpu.memory_space<vmem>>, vector<1x16x16xf32>
    %54 = vector.shape_cast %53 : vector<1x16x16xf32> to vector<16x16xf32>
    %55 = arith.addf %52, %54 : vector<16x16xf32>
    %cst_40 = arith.constant 0.000000e+00 : f32
    %56 = vector.broadcast %cst_40 : f32 to vector<16x16xf32>
    %57 = arith.subf %56, %55 : vector<16x16xf32>
    %58 = math.exp %57 : vector<16x16xf32>
    %cst_41 = arith.constant 1.000000e+00 : f32
    %59 = vector.broadcast %cst_41 : f32 to vector<16x16xf32>
    %60 = arith.addf %59, %58 : vector<16x16xf32>
    %61 = tpu.reciprocal %60 {approx = true} : vector<16x16xf32> -> vector<16x16xf32>
    %c0_42 = arith.constant 0 : index
    %c0_43 = arith.constant 0 : index
    %c384 = arith.constant 384 : index
    %62 = vector.load %arg3[%c0_42, %c0_43, %c384] : memref<1x16x1024xf32, #tpu.memory_space<vmem>>, vector<1x16x16xf32>
    %63 = vector.shape_cast %62 : vector<1x16x16xf32> to vector<16x16xf32>
    %cst_44 = arith.constant dense<0.000000e+00> : vector<16x16xf32>
    %64 = tpu.matmul %63, %61, %cst_44 {dimension_numbers = #tpu.dot_dimension_numbers<[1], [0], [0], [1], [0, 0, 1, 1], [], []>} : vector<16x16xf32>, vector<16x16xf32>, vector<16x16xf32> -> vector<16x16xf32>
    %cst_45 = arith.constant dense<0xFF800000> : vector<16xf32>
    %65 = vector.multi_reduction <maximumf>, %64, %cst_45 [0] : vector<16x16xf32> to vector<16xf32>
    %66 = vector.shape_cast %65 : vector<16xf32> to vector<1x16xf32>
    %67 = vector.broadcast %66 : vector<1x16xf32> to vector<16x16xf32>
    %68 = arith.subf %64, %67 : vector<16x16xf32>
    %69 = math.exp %68 : vector<16x16xf32>
    %cst_46 = arith.constant dense<0.000000e+00> : vector<16xf32>
    %70 = vector.multi_reduction <add>, %69, %cst_46 [0] : vector<16x16xf32> to vector<16xf32>
    %71 = vector.shape_cast %70 : vector<16xf32> to vector<1x16xf32>
    %72 = tpu.reciprocal %71 {approx = true} : vector<1x16xf32> -> vector<1x16xf32>
    %73 = vector.broadcast %72 : vector<1x16xf32> to vector<16x16xf32>
    %74 = arith.mulf %69, %73 : vector<16x16xf32>
    %c0_47 = arith.constant 0 : index
    %c0_48 = arith.constant 0 : index
    %c512 = arith.constant 512 : index
    %75 = vector.load %arg3[%c0_47, %c0_48, %c512] : memref<1x16x1024xf32, #tpu.memory_space<vmem>>, vector<1x16x16xf32>
    %76 = vector.shape_cast %75 : vector<1x16x16xf32> to vector<16x16xf32>
    %77 = arith.mulf %74, %76 : vector<16x16xf32>
    %cst_49 = arith.constant dense<0.000000e+00> : vector<16x32xf32>
    %78 = tpu.matmul %77, %6, %cst_49 {dimension_numbers = #tpu.dot_dimension_numbers<[1], [0], [0], [1], [0, 0, 1, 1], [], []>} : vector<16x16xf32>, vector<16x32xf32>, vector<16x32xf32> -> vector<16x32xf32>
    %c0_50 = arith.constant 0 : index
    %c0_51 = arith.constant 0 : index
    %c0_52 = arith.constant 0 : index
    %79 = vector.load %arg5[%c0_50, %c0_51, %c0_52] : memref<1x32x256xf32, #tpu.memory_space<vmem>>, vector<1x32x128xf32>
    %80 = vector.shape_cast %79 : vector<1x32x128xf32> to vector<32x128xf32>
    %cst_53 = arith.constant dense<0.000000e+00> : vector<16x128xf32>
    %81 = tpu.matmul %78, %80, %cst_53 {dimension_numbers = #tpu.dot_dimension_numbers<[1], [0], [0], [1], [0, 0, 1, 1], [], []>} : vector<16x32xf32>, vector<32x128xf32>, vector<16x128xf32> -> vector<16x128xf32>
    %cst_54 = arith.constant 0.000000e+00 : f32
    %82 = vector.broadcast %cst_54 : f32 to vector<16x128xf32>
    %83 = arith.maximumf %81, %82 : vector<16x128xf32>
    %c0_55 = arith.constant 0 : index
    %c0_56 = arith.constant 0 : index
    %c0_57 = arith.constant 0 : index
    %84 = vector.load %arg6[%c0_55, %c0_56, %c0_57] : memref<1x128x256xf32, #tpu.memory_space<vmem>>, vector<1x128x128xf32>
    %85 = vector.shape_cast %84 : vector<1x128x128xf32> to vector<128x128xf32>
    %cst_58 = arith.constant dense<0.000000e+00> : vector<16x128xf32>
    %86 = tpu.matmul %83, %85, %cst_58 {dimension_numbers = #tpu.dot_dimension_numbers<[1], [0], [0], [1], [0, 0, 1, 1], [], []>} : vector<16x128xf32>, vector<128x128xf32>, vector<16x128xf32> -> vector<16x128xf32>
    %c0_59 = arith.constant 0 : index
    %c0_60 = arith.constant 0 : index
    %c128_61 = arith.constant 128 : index
    %87 = vector.load %arg5[%c0_59, %c0_60, %c128_61] : memref<1x32x256xf32, #tpu.memory_space<vmem>>, vector<1x32x128xf32>
    %88 = vector.shape_cast %87 : vector<1x32x128xf32> to vector<32x128xf32>
    %cst_62 = arith.constant dense<0.000000e+00> : vector<16x128xf32>
    %89 = tpu.matmul %6, %88, %cst_62 {dimension_numbers = #tpu.dot_dimension_numbers<[1], [0], [0], [1], [0, 0, 1, 1], [], []>} : vector<16x32xf32>, vector<32x128xf32>, vector<16x128xf32> -> vector<16x128xf32>
    %90 = arith.addf %86, %89 : vector<16x128xf32>
    %c0_63 = arith.constant 0 : index
    %c0_64 = arith.constant 0 : index
    %c128_65 = arith.constant 128 : index
    %91 = vector.load %arg7[%c0_63, %c0_64, %c128_65] : memref<1x1x640xf32, #tpu.memory_space<vmem>>, vector<1x1x128xf32>
    %92 = vector.shape_cast %91 : vector<1x1x128xf32> to vector<1x128xf32>
    %93 = vector.broadcast %92 : vector<1x128xf32> to vector<16x128xf32>
    %94 = arith.addf %90, %93 : vector<16x128xf32>
    %cst_66 = arith.constant 0.000000e+00 : f32
    %95 = vector.broadcast %cst_66 : f32 to vector<16x128xf32>
    %96 = arith.maximumf %94, %95 : vector<16x128xf32>
    %c0_67 = arith.constant 0 : index
    %c0_68 = arith.constant 0 : index
    %97 = vector.load %arg9[%c0_67, %c0_68] : memref<128x128xf32, #tpu.memory_space<vmem>>, vector<128x128xf32>
    %cst_69 = arith.constant dense<0.000000e+00> : vector<16x128xf32>
    %98 = tpu.matmul %96, %97, %cst_69 {dimension_numbers = #tpu.dot_dimension_numbers<[1], [0], [0], [1], [0, 0, 1, 1], [], []>} : vector<16x128xf32>, vector<128x128xf32>, vector<16x128xf32> -> vector<16x128xf32>
    %99 = arith.subf %96, %98 : vector<16x128xf32>
    %100 = arith.mulf %99, %99 : vector<16x128xf32>
    %c0_70 = arith.constant 0 : index
    %c0_71 = arith.constant 0 : index
    %101 = vector.load %arg9[%c0_70, %c0_71] : memref<128x128xf32, #tpu.memory_space<vmem>>, vector<128x128xf32>
    %cst_72 = arith.constant dense<0.000000e+00> : vector<16x128xf32>
    %102 = tpu.matmul %100, %101, %cst_72 {dimension_numbers = #tpu.dot_dimension_numbers<[1], [0], [0], [1], [0, 0, 1, 1], [], []>} : vector<16x128xf32>, vector<128x128xf32>, vector<16x128xf32> -> vector<16x128xf32>
    %cst_73 = arith.constant 9.99999974E-6 : f32
    %103 = vector.broadcast %cst_73 : f32 to vector<16x128xf32>
    %104 = arith.addf %102, %103 : vector<16x128xf32>
    %105 = math.rsqrt %104 : vector<16x128xf32>
    %106 = arith.mulf %99, %105 : vector<16x128xf32>
    %c0_74 = arith.constant 0 : index
    %c0_75 = arith.constant 0 : index
    %c256_76 = arith.constant 256 : index
    %107 = vector.load %arg7[%c0_74, %c0_75, %c256_76] : memref<1x1x640xf32, #tpu.memory_space<vmem>>, vector<1x1x128xf32>
    %108 = vector.shape_cast %107 : vector<1x1x128xf32> to vector<1x128xf32>
    %109 = vector.broadcast %108 : vector<1x128xf32> to vector<16x128xf32>
    %110 = arith.mulf %106, %109 : vector<16x128xf32>
    %c0_77 = arith.constant 0 : index
    %c0_78 = arith.constant 0 : index
    %c384_79 = arith.constant 384 : index
    %111 = vector.load %arg7[%c0_77, %c0_78, %c384_79] : memref<1x1x640xf32, #tpu.memory_space<vmem>>, vector<1x1x128xf32>
    %112 = vector.shape_cast %111 : vector<1x1x128xf32> to vector<1x128xf32>
    %113 = vector.broadcast %112 : vector<1x128xf32> to vector<16x128xf32>
    %114 = arith.addf %110, %113 : vector<16x128xf32>
    %c0_80 = arith.constant 0 : index
    %c0_81 = arith.constant 0 : index
    %c128_82 = arith.constant 128 : index
    %115 = vector.load %arg6[%c0_80, %c0_81, %c128_82] : memref<1x128x256xf32, #tpu.memory_space<vmem>>, vector<1x128x4xf32>
    %116 = vector.shape_cast %115 : vector<1x128x4xf32> to vector<128x4xf32>
    %cst_83 = arith.constant dense<0.000000e+00> : vector<16x4xf32>
    %117 = tpu.matmul %114, %116, %cst_83 {dimension_numbers = #tpu.dot_dimension_numbers<[1], [0], [0], [1], [0, 0, 1, 1], [], []>} : vector<16x128xf32>, vector<128x4xf32>, vector<16x4xf32> -> vector<16x4xf32>
    %c0_84 = arith.constant 0 : index
    %c0_85 = arith.constant 0 : index
    %c512_86 = arith.constant 512 : index
    %118 = vector.load %arg7[%c0_84, %c0_85, %c512_86] : memref<1x1x640xf32, #tpu.memory_space<vmem>>, vector<1x1x4xf32>
    %119 = vector.shape_cast %118 : vector<1x1x4xf32> to vector<1x4xf32>
    %120 = vector.broadcast %119 : vector<1x4xf32> to vector<16x4xf32>
    %121 = arith.addf %117, %120 : vector<16x4xf32>
    %c0_87 = arith.constant 0 : index
    %c0_88 = arith.constant 0 : index
    %c0_89 = arith.constant 0 : index
    %122 = vector.load %arg10[%c0_87, %c0_88, %c0_89] : memref<2x16x4xf32, #tpu.memory_space<vmem>>, vector<1x16x4xf32>
    %123 = vector.shape_cast %122 : vector<1x16x4xf32> to vector<16x4xf32>
    %c0_90 = arith.constant 0 : index
    %c0_91 = arith.constant 0 : index
    %c896 = arith.constant 896 : index
    %124 = vector.load %arg3[%c0_90, %c0_91, %c896] : memref<1x16x1024xf32, #tpu.memory_space<vmem>>, vector<1x16x4xf32>
    %125 = vector.shape_cast %124 : vector<1x16x4xf32> to vector<16x4xf32>
    %126 = arith.mulf %121, %125 : vector<16x4xf32>
    %127 = arith.addf %123, %126 : vector<16x4xf32>
    %c0_92 = arith.constant 0 : index
    %c0_93 = arith.constant 0 : index
    %c0_94 = arith.constant 0 : index
    %128 = vector.load %arg10[%c0_92, %c0_93, %c0_94] : memref<2x16x4xf32, #tpu.memory_space<vmem>>, vector<1x16x4xf32>
    %129 = vector.shape_cast %128 : vector<1x16x4xf32> to vector<16x4xf32>
    %130 = vector.shape_cast %127 : vector<16x4xf32> to vector<1x16x4xf32>
    tpu.vector_store %arg10[%c0_92, %c0_93, %c0_94], %130 {strides = array<i32>} : memref<2x16x4xf32, #tpu.memory_space<vmem>>, vector<1x16x4xf32>,
    %c1 = arith.constant 1 : index
    %c0_95 = arith.constant 0 : index
    %c0_96 = arith.constant 0 : index
    %131 = vector.load %arg1[%c1, %c0_95, %c0_96] : memref<2x64x8xf32, #tpu.memory_space<vmem>>, vector<1x64x8xf32>
    %132 = vector.shape_cast %131 : vector<1x64x8xf32> to vector<64x8xf32>
    %c1_97 = arith.constant 1 : index
    %c0_98 = arith.constant 0 : index
    %c0_99 = arith.constant 0 : index
    %133 = vector.load %arg2[%c1_97, %c0_98, %c0_99] : memref<2x16x32xf32, #tpu.memory_space<vmem>>, vector<1x16x32xf32>
    %134 = vector.shape_cast %133 : vector<1x16x32xf32> to vector<16x32xf32>
    %c0_100 = arith.constant 0 : index
    %c0_101 = arith.constant 0 : index
    %c0_102 = arith.constant 0 : index
    %135 = vector.load %arg4[%c0_100, %c0_101, %c0_102] : memref<1x64x256xf32, #tpu.memory_space<vmem>>, vector<1x64x16xf32>
    %136 = vector.shape_cast %135 : vector<1x64x16xf32> to vector<64x16xf32>
    %cst_103 = arith.constant dense<0.000000e+00> : vector<8x16xf32>
    %137 = tpu.matmul %132, %136, %cst_103 {dimension_numbers = #tpu.dot_dimension_numbers<[0], [0], [1], [1], [0, 1, 1, 1], [], []>} : vector<64x8xf32>, vector<64x16xf32>, vector<8x16xf32> -> vector<8x16xf32>
    %c0_104 = arith.constant 0 : index
    %c0_105 = arith.constant 0 : index
    %c0_106 = arith.constant 0 : index
    %138 = vector.load %arg3[%c0_104, %c0_105, %c0_106] : memref<1x16x1024xf32, #tpu.memory_space<vmem>>, vector<1x16x64xf32>
    %139 = vector.shape_cast %138 : vector<1x16x64xf32> to vector<16x64xf32>
    %cst_107 = arith.constant dense<0.000000e+00> : vector<16x8xf32>
    %140 = tpu.matmul %139, %132, %cst_107 {dimension_numbers = #tpu.dot_dimension_numbers<[1], [0], [0], [1], [0, 0, 1, 1], [], []>} : vector<16x64xf32>, vector<64x8xf32>, vector<16x8xf32> -> vector<16x8xf32>
    %cst_108 = arith.constant dense<0.000000e+00> : vector<8x8xf32>
    %141 = tpu.matmul %137, %140, %cst_108 {dimension_numbers = #tpu.dot_dimension_numbers<[1], [0], [0], [1], [0, 0, 1, 1], [], []>} : vector<8x16xf32>, vector<16x8xf32>, vector<8x8xf32> -> vector<8x8xf32>
    %c0_109 = arith.constant 0 : index
    %c0_110 = arith.constant 0 : index
    %c640_111 = arith.constant 640 : index
    %142 = vector.load %arg3[%c0_109, %c0_110, %c640_111] : memref<1x16x1024xf32, #tpu.memory_space<vmem>>, vector<1x8x8xf32>
    %143 = vector.shape_cast %142 : vector<1x8x8xf32> to vector<8x8xf32>
    %144 = arith.addf %141, %143 : vector<8x8xf32>
    %cst_112 = arith.constant 0.000000e+00 : f32
    %145 = vector.broadcast %cst_112 : f32 to vector<8x8xf32>
    %146 = arith.subf %145, %144 : vector<8x8xf32>
    %147 = math.exp %146 : vector<8x8xf32>
    %cst_113 = arith.constant 1.000000e+00 : f32
    %148 = vector.broadcast %cst_113 : f32 to vector<8x8xf32>
    %149 = arith.addf %148, %147 : vector<8x8xf32>
    %150 = tpu.reciprocal %149 {approx = true} : vector<8x8xf32> -> vector<8x8xf32>
    %c0_114 = arith.constant 0 : index
    %c0_115 = arith.constant 0 : index
    %c768_116 = arith.constant 768 : index
    %151 = vector.load %arg3[%c0_114, %c0_115, %c768_116] : memref<1x16x1024xf32, #tpu.memory_space<vmem>>, vector<1x8x8xf32>
    %152 = vector.shape_cast %151 : vector<1x8x8xf32> to vector<8x8xf32>
    %cst_117 = arith.constant dense<0.000000e+00> : vector<8x8xf32>
    %153 = tpu.matmul %152, %150, %cst_117 {dimension_numbers = #tpu.dot_dimension_numbers<[1], [0], [0], [1], [0, 0, 1, 1], [], []>} : vector<8x8xf32>, vector<8x8xf32>, vector<8x8xf32> -> vector<8x8xf32>
    %cst_118 = arith.constant dense<0xFF800000> : vector<8xf32>
    %154 = vector.multi_reduction <maximumf>, %153, %cst_118 [0] : vector<8x8xf32> to vector<8xf32>
    %155 = vector.shape_cast %154 : vector<8xf32> to vector<1x8xf32>
    %156 = vector.broadcast %155 : vector<1x8xf32> to vector<8x8xf32>
    %157 = arith.subf %153, %156 : vector<8x8xf32>
    %158 = math.exp %157 : vector<8x8xf32>
    %cst_119 = arith.constant dense<0.000000e+00> : vector<8xf32>
    %159 = vector.multi_reduction <add>, %158, %cst_119 [0] : vector<8x8xf32> to vector<8xf32>
    %160 = vector.shape_cast %159 : vector<8xf32> to vector<1x8xf32>
    %161 = tpu.reciprocal %160 {approx = true} : vector<1x8xf32> -> vector<1x8xf32>
    %162 = vector.broadcast %161 : vector<1x8xf32> to vector<8x8xf32>
    %163 = arith.mulf %158, %162 : vector<8x8xf32>
    %cst_120 = arith.constant dense<0.000000e+00> : vector<64x8xf32>
    %164 = tpu.matmul %132, %163, %cst_120 {dimension_numbers = #tpu.dot_dimension_numbers<[1], [0], [0], [1], [0, 0, 1, 1], [], []>} : vector<64x8xf32>, vector<8x8xf32>, vector<64x8xf32> -> vector<64x8xf32>
    %c0_121 = arith.constant 0 : index
    %c0_122 = arith.constant 0 : index
    %c0_123 = arith.constant 0 : index
    %165 = vector.load %arg7[%c0_121, %c0_122, %c0_123] : memref<1x1x640xf32, #tpu.memory_space<vmem>>, vector<1x1x8xf32>
    %166 = vector.shape_cast %165 : vector<1x1x8xf32> to vector<1x8xf32>
    %167 = vector.broadcast %166 : vector<1x8xf32> to vector<64x8xf32>
    %168 = arith.mulf %164, %167 : vector<64x8xf32>
    %cst_124 = arith.constant dense<0.000000e+00> : vector<64xf32>
    %169 = vector.multi_reduction <add>, %168, %cst_124 [1] : vector<64x8xf32> to vector<64xf32>
    %170 = vector.shape_cast %169 : vector<64xf32> to vector<64x1xf32>
    %c0_125 = arith.constant 0 : index
    %c0_126 = arith.constant 0 : index
    %171 = vector.load %arg8[%c0_125, %c0_126] : memref<16x64xf32, #tpu.memory_space<vmem>>, vector<16x64xf32>
    %c0_127 = arith.constant 0 : index
    %c0_128 = arith.constant 0 : index
    %c128_129 = arith.constant 128 : index
    %172 = vector.load %arg4[%c0_127, %c0_128, %c128_129] : memref<1x64x256xf32, #tpu.memory_space<vmem>>, vector<1x64x8xf32>
    %173 = vector.shape_cast %172 : vector<1x64x8xf32> to vector<64x8xf32>
    %174 = vector.broadcast %170 : vector<64x1xf32> to vector<64x8xf32>
    %175 = arith.mulf %174, %173 : vector<64x8xf32>
    %cst_130 = arith.constant dense<0.000000e+00> : vector<16x8xf32>
    %176 = tpu.matmul %171, %175, %cst_130 {dimension_numbers = #tpu.dot_dimension_numbers<[1], [0], [0], [1], [0, 0, 1, 1], [], []>} : vector<16x64xf32>, vector<64x8xf32>, vector<16x8xf32> -> vector<16x8xf32>
    %c0_131 = arith.constant 0 : index
    %c0_132 = arith.constant 0 : index
    %c128_133 = arith.constant 128 : index
    %177 = vector.load %arg3[%c0_131, %c0_132, %c128_133] : memref<1x16x1024xf32, #tpu.memory_space<vmem>>, vector<1x16x64xf32>
    %178 = vector.shape_cast %177 : vector<1x16x64xf32> to vector<16x64xf32>
    %cst_134 = arith.constant dense<0.000000e+00> : vector<16x8xf32>
    %179 = tpu.matmul %178, %164, %cst_134 {dimension_numbers = #tpu.dot_dimension_numbers<[1], [0], [0], [1], [0, 0, 1, 1], [], []>} : vector<16x64xf32>, vector<64x8xf32>, vector<16x8xf32> -> vector<16x8xf32>
    %cst_135 = arith.constant dense<0.000000e+00> : vector<16x16xf32>
    %180 = tpu.matmul %176, %179, %cst_135 {dimension_numbers = #tpu.dot_dimension_numbers<[1], [1], [0], [0], [0, 0, 1, 0], [], []>} : vector<16x8xf32>, vector<16x8xf32>, vector<16x16xf32> -> vector<16x16xf32>
    %c0_136 = arith.constant 0 : index
    %c0_137 = arith.constant 0 : index
    %c256_138 = arith.constant 256 : index
    %181 = vector.load %arg3[%c0_136, %c0_137, %c256_138] : memref<1x16x1024xf32, #tpu.memory_space<vmem>>, vector<1x16x16xf32>
    %182 = vector.shape_cast %181 : vector<1x16x16xf32> to vector<16x16xf32>
    %183 = arith.addf %180, %182 : vector<16x16xf32>
    %cst_139 = arith.constant 0.000000e+00 : f32
    %184 = vector.broadcast %cst_139 : f32 to vector<16x16xf32>
    %185 = arith.subf %184, %183 : vector<16x16xf32>
    %186 = math.exp %185 : vector<16x16xf32>
    %cst_140 = arith.constant 1.000000e+00 : f32
    %187 = vector.broadcast %cst_140 : f32 to vector<16x16xf32>
    %188 = arith.addf %187, %186 : vector<16x16xf32>
    %189 = tpu.reciprocal %188 {approx = true} : vector<16x16xf32> -> vector<16x16xf32>
    %c0_141 = arith.constant 0 : index
    %c0_142 = arith.constant 0 : index
    %c384_143 = arith.constant 384 : index
    %190 = vector.load %arg3[%c0_141, %c0_142, %c384_143] : memref<1x16x1024xf32, #tpu.memory_space<vmem>>, vector<1x16x16xf32>
    %191 = vector.shape_cast %190 : vector<1x16x16xf32> to vector<16x16xf32>
    %cst_144 = arith.constant dense<0.000000e+00> : vector<16x16xf32>
    %192 = tpu.matmul %191, %189, %cst_144 {dimension_numbers = #tpu.dot_dimension_numbers<[1], [0], [0], [1], [0, 0, 1, 1], [], []>} : vector<16x16xf32>, vector<16x16xf32>, vector<16x16xf32> -> vector<16x16xf32>
    %cst_145 = arith.constant dense<0xFF800000> : vector<16xf32>
    %193 = vector.multi_reduction <maximumf>, %192, %cst_145 [0] : vector<16x16xf32> to vector<16xf32>
    %194 = vector.shape_cast %193 : vector<16xf32> to vector<1x16xf32>
    %195 = vector.broadcast %194 : vector<1x16xf32> to vector<16x16xf32>
    %196 = arith.subf %192, %195 : vector<16x16xf32>
    %197 = math.exp %196 : vector<16x16xf32>
    %cst_146 = arith.constant dense<0.000000e+00> : vector<16xf32>
    %198 = vector.multi_reduction <add>, %197, %cst_146 [0] : vector<16x16xf32> to vector<16xf32>
    %199 = vector.shape_cast %198 : vector<16xf32> to vector<1x16xf32>
    %200 = tpu.reciprocal %199 {approx = true} : vector<1x16xf32> -> vector<1x16xf32>
    %201 = vector.broadcast %200 : vector<1x16xf32> to vector<16x16xf32>
    %202 = arith.mulf %197, %201 : vector<16x16xf32>
    %c0_147 = arith.constant 0 : index
    %c0_148 = arith.constant 0 : index
    %c512_149 = arith.constant 512 : index
    %203 = vector.load %arg3[%c0_147, %c0_148, %c512_149] : memref<1x16x1024xf32, #tpu.memory_space<vmem>>, vector<1x16x16xf32>
    %204 = vector.shape_cast %203 : vector<1x16x16xf32> to vector<16x16xf32>
    %205 = arith.mulf %202, %204 : vector<16x16xf32>
    %cst_150 = arith.constant dense<0.000000e+00> : vector<16x32xf32>
    %206 = tpu.matmul %205, %134, %cst_150 {dimension_numbers = #tpu.dot_dimension_numbers<[1], [0], [0], [1], [0, 0, 1, 1], [], []>} : vector<16x16xf32>, vector<16x32xf32>, vector<16x32xf32> -> vector<16x32xf32>
    %c0_151 = arith.constant 0 : index
    %c0_152 = arith.constant 0 : index
    %c0_153 = arith.constant 0 : index
    %207 = vector.load %arg5[%c0_151, %c0_152, %c0_153] : memref<1x32x256xf32, #tpu.memory_space<vmem>>, vector<1x32x128xf32>
    %208 = vector.shape_cast %207 : vector<1x32x128xf32> to vector<32x128xf32>
    %cst_154 = arith.constant dense<0.000000e+00> : vector<16x128xf32>
    %209 = tpu.matmul %206, %208, %cst_154 {dimension_numbers = #tpu.dot_dimension_numbers<[1], [0], [0], [1], [0, 0, 1, 1], [], []>} : vector<16x32xf32>, vector<32x128xf32>, vector<16x128xf32> -> vector<16x128xf32>
    %cst_155 = arith.constant 0.000000e+00 : f32
    %210 = vector.broadcast %cst_155 : f32 to vector<16x128xf32>
    %211 = arith.maximumf %209, %210 : vector<16x128xf32>
    %c0_156 = arith.constant 0 : index
    %c0_157 = arith.constant 0 : index
    %c0_158 = arith.constant 0 : index
    %212 = vector.load %arg6[%c0_156, %c0_157, %c0_158] : memref<1x128x256xf32, #tpu.memory_space<vmem>>, vector<1x128x128xf32>
    %213 = vector.shape_cast %212 : vector<1x128x128xf32> to vector<128x128xf32>
    %cst_159 = arith.constant dense<0.000000e+00> : vector<16x128xf32>
    %214 = tpu.matmul %211, %213, %cst_159 {dimension_numbers = #tpu.dot_dimension_numbers<[1], [0], [0], [1], [0, 0, 1, 1], [], []>} : vector<16x128xf32>, vector<128x128xf32>, vector<16x128xf32> -> vector<16x128xf32>
    %c0_160 = arith.constant 0 : index
    %c0_161 = arith.constant 0 : index
    %c128_162 = arith.constant 128 : index
    %215 = vector.load %arg5[%c0_160, %c0_161, %c128_162] : memref<1x32x256xf32, #tpu.memory_space<vmem>>, vector<1x32x128xf32>
    %216 = vector.shape_cast %215 : vector<1x32x128xf32> to vector<32x128xf32>
    %cst_163 = arith.constant dense<0.000000e+00> : vector<16x128xf32>
    %217 = tpu.matmul %134, %216, %cst_163 {dimension_numbers = #tpu.dot_dimension_numbers<[1], [0], [0], [1], [0, 0, 1, 1], [], []>} : vector<16x32xf32>, vector<32x128xf32>, vector<16x128xf32> -> vector<16x128xf32>
    %218 = arith.addf %214, %217 : vector<16x128xf32>
    %c0_164 = arith.constant 0 : index
    %c0_165 = arith.constant 0 : index
    %c128_166 = arith.constant 128 : index
    %219 = vector.load %arg7[%c0_164, %c0_165, %c128_166] : memref<1x1x640xf32, #tpu.memory_space<vmem>>, vector<1x1x128xf32>
    %220 = vector.shape_cast %219 : vector<1x1x128xf32> to vector<1x128xf32>
    %221 = vector.broadcast %220 : vector<1x128xf32> to vector<16x128xf32>
    %222 = arith.addf %218, %221 : vector<16x128xf32>
    %cst_167 = arith.constant 0.000000e+00 : f32
    %223 = vector.broadcast %cst_167 : f32 to vector<16x128xf32>
    %224 = arith.maximumf %222, %223 : vector<16x128xf32>
    %c0_168 = arith.constant 0 : index
    %c0_169 = arith.constant 0 : index
    %225 = vector.load %arg9[%c0_168, %c0_169] : memref<128x128xf32, #tpu.memory_space<vmem>>, vector<128x128xf32>
    %cst_170 = arith.constant dense<0.000000e+00> : vector<16x128xf32>
    %226 = tpu.matmul %224, %225, %cst_170 {dimension_numbers = #tpu.dot_dimension_numbers<[1], [0], [0], [1], [0, 0, 1, 1], [], []>} : vector<16x128xf32>, vector<128x128xf32>, vector<16x128xf32> -> vector<16x128xf32>
    %227 = arith.subf %224, %226 : vector<16x128xf32>
    %228 = arith.mulf %227, %227 : vector<16x128xf32>
    %c0_171 = arith.constant 0 : index
    %c0_172 = arith.constant 0 : index
    %229 = vector.load %arg9[%c0_171, %c0_172] : memref<128x128xf32, #tpu.memory_space<vmem>>, vector<128x128xf32>
    %cst_173 = arith.constant dense<0.000000e+00> : vector<16x128xf32>
    %230 = tpu.matmul %228, %229, %cst_173 {dimension_numbers = #tpu.dot_dimension_numbers<[1], [0], [0], [1], [0, 0, 1, 1], [], []>} : vector<16x128xf32>, vector<128x128xf32>, vector<16x128xf32> -> vector<16x128xf32>
    %cst_174 = arith.constant 9.99999974E-6 : f32
    %231 = vector.broadcast %cst_174 : f32 to vector<16x128xf32>
    %232 = arith.addf %230, %231 : vector<16x128xf32>
    %233 = math.rsqrt %232 : vector<16x128xf32>
    %234 = arith.mulf %227, %233 : vector<16x128xf32>
    %c0_175 = arith.constant 0 : index
    %c0_176 = arith.constant 0 : index
    %c256_177 = arith.constant 256 : index
    %235 = vector.load %arg7[%c0_175, %c0_176, %c256_177] : memref<1x1x640xf32, #tpu.memory_space<vmem>>, vector<1x1x128xf32>
    %236 = vector.shape_cast %235 : vector<1x1x128xf32> to vector<1x128xf32>
    %237 = vector.broadcast %236 : vector<1x128xf32> to vector<16x128xf32>
    %238 = arith.mulf %234, %237 : vector<16x128xf32>
    %c0_178 = arith.constant 0 : index
    %c0_179 = arith.constant 0 : index
    %c384_180 = arith.constant 384 : index
    %239 = vector.load %arg7[%c0_178, %c0_179, %c384_180] : memref<1x1x640xf32, #tpu.memory_space<vmem>>, vector<1x1x128xf32>
    %240 = vector.shape_cast %239 : vector<1x1x128xf32> to vector<1x128xf32>
    %241 = vector.broadcast %240 : vector<1x128xf32> to vector<16x128xf32>
    %242 = arith.addf %238, %241 : vector<16x128xf32>
    %c0_181 = arith.constant 0 : index
    %c0_182 = arith.constant 0 : index
    %c128_183 = arith.constant 128 : index
    %243 = vector.load %arg6[%c0_181, %c0_182, %c128_183] : memref<1x128x256xf32, #tpu.memory_space<vmem>>, vector<1x128x4xf32>
    %244 = vector.shape_cast %243 : vector<1x128x4xf32> to vector<128x4xf32>
    %cst_184 = arith.constant dense<0.000000e+00> : vector<16x4xf32>
    %245 = tpu.matmul %242, %244, %cst_184 {dimension_numbers = #tpu.dot_dimension_numbers<[1], [0], [0], [1], [0, 0, 1, 1], [], []>} : vector<16x128xf32>, vector<128x4xf32>, vector<16x4xf32> -> vector<16x4xf32>
    %c0_185 = arith.constant 0 : index
    %c0_186 = arith.constant 0 : index
    %c512_187 = arith.constant 512 : index
    %246 = vector.load %arg7[%c0_185, %c0_186, %c512_187] : memref<1x1x640xf32, #tpu.memory_space<vmem>>, vector<1x1x4xf32>
    %247 = vector.shape_cast %246 : vector<1x1x4xf32> to vector<1x4xf32>
    %248 = vector.broadcast %247 : vector<1x4xf32> to vector<16x4xf32>
    %249 = arith.addf %245, %248 : vector<16x4xf32>
    %c1_188 = arith.constant 1 : index
    %c0_189 = arith.constant 0 : index
    %c0_190 = arith.constant 0 : index
    %250 = vector.load %arg10[%c1_188, %c0_189, %c0_190] : memref<2x16x4xf32, #tpu.memory_space<vmem>>, vector<1x16x4xf32>
    %251 = vector.shape_cast %250 : vector<1x16x4xf32> to vector<16x4xf32>
    %c0_191 = arith.constant 0 : index
    %c0_192 = arith.constant 0 : index
    %c896_193 = arith.constant 896 : index
    %252 = vector.load %arg3[%c0_191, %c0_192, %c896_193] : memref<1x16x1024xf32, #tpu.memory_space<vmem>>, vector<1x16x4xf32>
    %253 = vector.shape_cast %252 : vector<1x16x4xf32> to vector<16x4xf32>
    %254 = arith.mulf %249, %253 : vector<16x4xf32>
    %255 = arith.addf %251, %254 : vector<16x4xf32>
    %c1_194 = arith.constant 1 : index
    %c0_195 = arith.constant 0 : index
    %c0_196 = arith.constant 0 : index
    %256 = vector.load %arg10[%c1_194, %c0_195, %c0_196] : memref<2x16x4xf32, #tpu.memory_space<vmem>>, vector<1x16x4xf32>
    %257 = vector.shape_cast %256 : vector<1x16x4xf32> to vector<16x4xf32>
    %258 = vector.shape_cast %255 : vector<16x4xf32> to vector<1x16x4xf32>
    tpu.vector_store %arg10[%c1_194, %c0_195, %c0_196], %258 {strides = array<i32>} : memref<2x16x4xf32, #tpu.memory_space<vmem>>, vector<1x16x4xf32>,
    return
  }
  func.func @transform_0(%arg0: i32) -> (i32, i32, i32) {
    %c0_i32 = arith.constant 0 : i32
    %c0_i32_0 = arith.constant 0 : i32
    %c0_i32_1 = arith.constant 0 : i32
    %c0_i32_2 = arith.constant 0 : i32
    return %c0_i32, %c0_i32_0, %c0_i32_1 : i32, i32, i32
  }
  func.func @transform_1(%arg0: i32) -> (i32, i32, i32) {
    %c0_i32 = arith.constant 0 : i32
    %c0_i32_0 = arith.constant 0 : i32
    %c0_i32_1 = arith.constant 0 : i32
    %c0_i32_2 = arith.constant 0 : i32
    return %c0_i32, %c0_i32_0, %c0_i32_1 : i32, i32, i32
  }
  func.func @transform_2(%arg0: i32) -> (i32, i32, i32) {
    %c0_i32 = arith.constant 0 : i32
    %c0_i32_0 = arith.constant 0 : i32
    %c0_i32_1 = arith.constant 0 : i32
    return %arg0, %c0_i32, %c0_i32_0 : i32, i32, i32
  }
  func.func @transform_3(%arg0: i32) -> (i32, i32, i32) {
    %c0_i32 = arith.constant 0 : i32
    %c0_i32_0 = arith.constant 0 : i32
    %c0_i32_1 = arith.constant 0 : i32
    return %arg0, %c0_i32, %c0_i32_0 : i32, i32, i32
  }
  func.func @transform_4(%arg0: i32) -> (i32, i32, i32) {
    %c0_i32 = arith.constant 0 : i32
    %c0_i32_0 = arith.constant 0 : i32
    %c0_i32_1 = arith.constant 0 : i32
    return %arg0, %c0_i32, %c0_i32_0 : i32, i32, i32
  }
  func.func @transform_5(%arg0: i32) -> (i32, i32, i32) {
    %c0_i32 = arith.constant 0 : i32
    %c0_i32_0 = arith.constant 0 : i32
    %c0_i32_1 = arith.constant 0 : i32
    return %arg0, %c0_i32, %c0_i32_0 : i32, i32, i32
  }
  func.func @transform_6(%arg0: i32) -> (i32, i32, i32) {
    %c0_i32 = arith.constant 0 : i32
    %c0_i32_0 = arith.constant 0 : i32
    %c0_i32_1 = arith.constant 0 : i32
    return %arg0, %c0_i32, %c0_i32_0 : i32, i32, i32
  }
  func.func @transform_7(%arg0: i32) -> (i32, i32) {
    %c0_i32 = arith.constant 0 : i32
    %c0_i32_0 = arith.constant 0 : i32
    %c0_i32_1 = arith.constant 0 : i32
    return %c0_i32, %c0_i32_0 : i32, i32
  }
  func.func @transform_8(%arg0: i32) -> (i32, i32) {
    %c0_i32 = arith.constant 0 : i32
    %c0_i32_0 = arith.constant 0 : i32
    %c0_i32_1 = arith.constant 0 : i32
    return %c0_i32, %c0_i32_0 : i32, i32
  }
  func.func @transform_9(%arg0: i32) -> (i32, i32, i32) {
    %c0_i32 = arith.constant 0 : i32
    %c0_i32_0 = arith.constant 0 : i32
    %c0_i32_1 = arith.constant 0 : i32
    %c0_i32_2 = arith.constant 0 : i32
    return %c0_i32, %c0_i32_0, %c0_i32_1 : i32, i32, i32
  }
}

</mosaic_0001>

<llo_original>
// kernel: tpu_custom_call.1
$region0: #{tpu_custom_call.1}
  #allocation0 [shape = 'u32[]', space=smem, size = 0x4, offset = 0x4, fixed_abs, tag = 'smem constant byte address 0x4 - core index']
  #allocation1 [shape = 'u32[72,128]{1,0:T(1,128)}', space=vmem, size = 0x9000, scoped, tag = 'internal scratch']
  %s0 = inlined_call_operand.vmem [shape: f32[2,64,8], index: 0, kind: input, shape index: {}]
  %s1 = inlined_call_operand.hbm [shape: f32[2,16,32], index: 1, kind: input, shape index: {}]
  %s2 = inlined_call_operand.hbm [shape: f32[2,16,1024], index: 2, kind: input, shape index: {}]
  %s3 = inlined_call_operand.hbm [shape: f32[2,64,256], index: 3, kind: input, shape index: {}]
  %s4 = inlined_call_operand.vmem [shape: f32[2,32,256], index: 4, kind: input, shape index: {}]
  %s5 = inlined_call_operand.hbm [shape: f32[2,128,256], index: 5, kind: input, shape index: {}]
  %s6 = inlined_call_operand.hbm [shape: f32[2,1,640], index: 6, kind: input, shape index: {}]
  %s7 = inlined_call_operand.vmem [shape: f32[16,64], index: 7, kind: input, shape index: {}]
  %s8 = inlined_call_operand.hbm [shape: f32[128,128], index: 8, kind: input, shape index: {}]
  %s9 = inlined_call_operand.vmem [shape: f32[2,16,4], index: 9, kind: output, shape index: {}]
  %s10 = sld [smem:[#allocation0]]
  $region97: #{tpu_custom_call.1} parent=0
    _
  %s12 = ssub.s32 1, %s10
  %s13 = scalar_select 0, %s12, %s10
  $region1: #{tpu_custom_call.1} parent=0
    #allocation2 [shape = 'u8[16384]{0}', space=vmem, size = 0x4000, scoped, tag = 'input window, operand 1, single buffered']
    #allocation3 [shape = 's32[2]{0}', space=sflag, size = 0x8, scoped, tag = 'scoped memory for tpu_custom_call.1']
    #allocation4 [shape = 'u8[131072]{0}', space=vmem, size = 0x20000, scoped, tag = 'input window, operand 2']
    #allocation5 [shape = 's32[2]{0}', space=sflag, size = 0x8, scoped, tag = 'scoped memory for tpu_custom_call.1']
    #allocation6 [shape = 'u8[131072]{0}', space=vmem, size = 0x20000, scoped, tag = 'input window, operand 3']
    #allocation7 [shape = 'u8[262144]{0}', space=vmem, size = 0x40000, scoped, tag = 'input window, operand 5']
    #allocation8 [shape = 's32[2]{0}', space=sflag, size = 0x8, scoped, tag = 'scoped memory for tpu_custom_call.1']
    #allocation9 [shape = 'u8[5120]{0}', space=vmem, size = 0x1400, scoped, tag = 'input window, operand 6']
    #allocation10 [shape = 'u8[65536]{0}', space=vmem, size = 0x10000, scoped, tag = 'input window, operand 8, single buffered']
    #allocation11 [shape = 's32[1]{0}', space=sflag, size = 0x4, scoped, tag = 'scoped memory for tpu_custom_call.1']
    %14 = vsyncpa [#allocation3], 0
    %15 = vsyncpa [#allocation5], 0
    %s16 = scalar_lea.sflag [#allocation5], 1
    %17 = vsyncpa %s16, 0
    %18 = vsyncpa [#allocation8], 0
    %s19 = scalar_lea.sflag [#allocation8], 1
    %20 = vsyncpa %s19, 0
    %21 = vsyncpa [#allocation11], 0
    loop: start=0, step=1, limit=4
    $region2: #{tpu_custom_call.1} parent=1 // loop_pre_header
      _
    $region3: #{tpu_custom_call.1} parent=1 // loop_header
      %s23 = sphi 0, %s27
      %p24 = scmp.ge.s32.totalorder %s23, 4
      %s31 = sphi 0, %s31
      %s33 = sphi 0, %s31
      %s34 = sphi 0, %s33
      %s48 = sphi 0, %s34
      %s52 = sphi 0, %s52
      %s54 = sphi 0, %s52
      %s55 = sphi 0, %s54
      %s69 = sphi 0, %s55
      %s75 = sphi 0, %s77
      %s78 = sphi 0, %s75
      %s79 = sphi 0, %s78
      %s95 = sphi 0, %s79
      %s101 = sphi 0, %s103
      %s104 = sphi 0, %s101
      %s105 = sphi 0, %s104
      %s121 = sphi 0, %s105
      %s127 = sphi 0, %s129
      %s130 = sphi 0, %s127
      %s131 = sphi 0, %s130
      %s147 = sphi 0, %s131
      %s153 = sphi 0, %s155
      %s156 = sphi 0, %s153
      %s157 = sphi 0, %s156
      %s173 = sphi 0, %s157
      %s179 = sphi 0, %s181
      %s182 = sphi 0, %s179
      %s183 = sphi 0, %s182
      %s199 = sphi 0, %s183
      %s203 = sphi 0, %s203
      %s205 = sphi 0, %s203
      %s206 = sphi 0, %s205
      %s220 = sphi 0, %s206
      %s224 = sphi 0, %s224
      %s226 = sphi 0, %s224
      %s227 = sphi 0, %s226
      %s241 = sphi 0, %s227
      %s245 = sphi 0, %s245
      %s247 = sphi 0, %s245
      %s248 = sphi 0, %s247
      %s262 = sphi 0, %s248
    $region4: #{tpu_custom_call.1} parent=1 // loop_header_branch
      %26 = sbr.rel (%p24) target = $region8
    $region5: #{tpu_custom_call.1} parent=1 // loop_body
      %s28 = ssub.s32 %s23, 1
      %s29 = ssub.s32 %s23, 2
      %s30 = sadd.s32 %s23, 1
      %s32 = sadd.s32 %s31, 1
      %p35 = scmp.eq.s32.totalorder %s23, 1
      %p36 = scmp.ne.s32.totalorder %s31, %s33
      %p37 = scmp.eq.s32.totalorder %s23, 0
      %p38 = por %p36, %p37
      %p39 = scmp.ne.s32.totalorder %s31, %s33
      %p40 = scmp.eq.s32.totalorder %s28, 1
      %p41 = por %p39, %p40
      %p42 = scmp.ne.s32.totalorder %s33, %s34
      %p43 = scmp.eq.s32.totalorder %s28, 0
      %p44 = por %p42, %p43
      %p45 = scmp.ne.s32.totalorder %s33, %s34
      %p46 = scmp.eq.s32.totalorder %s29, 1
      %p47 = por %p45, %p46
      %p49 = scmp.ne.s32.totalorder %s34, %s48
      %p50 = scmp.eq.s32.totalorder %s29, 0
      %p51 = por %p49, %p50
      %s53 = sadd.s32 %s52, 1
      %p56 = scmp.eq.s32.totalorder %s23, 1
      %p57 = scmp.ne.s32.totalorder %s52, %s54
      %p58 = scmp.eq.s32.totalorder %s23, 0
      %p59 = por %p57, %p58
      %p60 = scmp.ne.s32.totalorder %s52, %s54
      %p61 = scmp.eq.s32.totalorder %s28, 1
      %p62 = por %p60, %p61
      %p63 = scmp.ne.s32.totalorder %s54, %s55
      %p64 = scmp.eq.s32.totalorder %s28, 0
      %p65 = por %p63, %p64
      %p66 = scmp.ne.s32.totalorder %s54, %s55
      %p67 = scmp.eq.s32.totalorder %s29, 1
      %p68 = por %p66, %p67
      %p70 = scmp.ne.s32.totalorder %s55, %s69
      %p71 = scmp.eq.s32.totalorder %s29, 0
      %p72 = por %p70, %p71
      %s73 = ssub.s32 %s23, %s30
      %p74 = scmp.eq.s32.totalorder %s73, 0
      %s76 = sadd.s32 %s75, 1
      %s77 = scalar_select %p74, %s75, %s76
      %p80 = pneg %p74
      %p81 = scmp.eq.s32.totalorder %s23, 1
      %p82 = por %p80, %p81
      %p83 = scmp.ne.s32.totalorder %s75, %s78
      %p84 = scmp.eq.s32.totalorder %s23, 0
      %p85 = por %p83, %p84
      %p86 = scmp.ne.s32.totalorder %s75, %s78
      %p87 = scmp.eq.s32.totalorder %s28, 1
      %p88 = por %p86, %p87
      %p89 = scmp.ne.s32.totalorder %s78, %s79
      %p90 = scmp.eq.s32.totalorder %s28, 0
      %p91 = por %p89, %p90
      %p92 = scmp.ne.s32.totalorder %s78, %s79
      %p93 = scmp.eq.s32.totalorder %s29, 1
      %p94 = por %p92, %p93
      %p96 = scmp.ne.s32.totalorder %s79, %s95
      %p97 = scmp.eq.s32.totalorder %s29, 0
      %p98 = por %p96, %p97
      %s99 = ssub.s32 %s23, %s30
      %p100 = scmp.eq.s32.totalorder %s99, 0
      %s102 = sadd.s32 %s101, 1
      %s103 = scalar_select %p100, %s101, %s102
      %p106 = pneg %p100
      %p107 = scmp.eq.s32.totalorder %s23, 1
      %p108 = por %p106, %p107
      %p109 = scmp.ne.s32.totalorder %s101, %s104
      %p110 = scmp.eq.s32.totalorder %s23, 0
      %p111 = por %p109, %p110
      %p112 = scmp.ne.s32.totalorder %s101, %s104
      %p113 = scmp.eq.s32.totalorder %s28, 1
      %p114 = por %p112, %p113
      %p115 = scmp.ne.s32.totalorder %s104, %s105
      %p116 = scmp.eq.s32.totalorder %s28, 0
      %p117 = por %p115, %p116
      %p118 = scmp.ne.s32.totalorder %s104, %s105
      %p119 = scmp.eq.s32.totalorder %s29, 1
      %p120 = por %p118, %p119
      %p122 = scmp.ne.s32.totalorder %s105, %s121
      %p123 = scmp.eq.s32.totalorder %s29, 0
      %p124 = por %p122, %p123
      %s125 = ssub.s32 %s23, %s30
      %p126 = scmp.eq.s32.totalorder %s125, 0
      %s128 = sadd.s32 %s127, 1
      %s129 = scalar_select %p126, %s127, %s128
      %p132 = pneg %p126
      %p133 = scmp.eq.s32.totalorder %s23, 1
      %p134 = por %p132, %p133
      %p135 = scmp.ne.s32.totalorder %s127, %s130
      %p136 = scmp.eq.s32.totalorder %s23, 0
      %p137 = por %p135, %p136
      %p138 = scmp.ne.s32.totalorder %s127, %s130
      %p139 = scmp.eq.s32.totalorder %s28, 1
      %p140 = por %p138, %p139
      %p141 = scmp.ne.s32.totalorder %s130, %s131
      %p142 = scmp.eq.s32.totalorder %s28, 0
      %p143 = por %p141, %p142
      %p144 = scmp.ne.s32.totalorder %s130, %s131
      %p145 = scmp.eq.s32.totalorder %s29, 1
      %p146 = por %p144, %p145
      %p148 = scmp.ne.s32.totalorder %s131, %s147
      %p149 = scmp.eq.s32.totalorder %s29, 0
      %p150 = por %p148, %p149
      %s151 = ssub.s32 %s23, %s30
      %p152 = scmp.eq.s32.totalorder %s151, 0
      %s154 = sadd.s32 %s153, 1
      %s155 = scalar_select %p152, %s153, %s154
      %p158 = pneg %p152
      %p159 = scmp.eq.s32.totalorder %s23, 1
      %p160 = por %p158, %p159
      %p161 = scmp.ne.s32.totalorder %s153, %s156
      %p162 = scmp.eq.s32.totalorder %s23, 0
      %p163 = por %p161, %p162
      %p164 = scmp.ne.s32.totalorder %s153, %s156
      %p165 = scmp.eq.s32.totalorder %s28, 1
      %p166 = por %p164, %p165
      %p167 = scmp.ne.s32.totalorder %s156, %s157
      %p168 = scmp.eq.s32.totalorder %s28, 0
      %p169 = por %p167, %p168
      %p170 = scmp.ne.s32.totalorder %s156, %s157
      %p171 = scmp.eq.s32.totalorder %s29, 1
      %p172 = por %p170, %p171
      %p174 = scmp.ne.s32.totalorder %s157, %s173
      %p175 = scmp.eq.s32.totalorder %s29, 0
      %p176 = por %p174, %p175
      %s177 = ssub.s32 %s23, %s30
      %p178 = scmp.eq.s32.totalorder %s177, 0
      %s180 = sadd.s32 %s179, 1
      %s181 = scalar_select %p178, %s179, %s180
      %p184 = pneg %p178
      %p185 = scmp.eq.s32.totalorder %s23, 1
      %p186 = por %p184, %p185
      %p187 = scmp.ne.s32.totalorder %s179, %s182
      %p188 = scmp.eq.s32.totalorder %s23, 0
      %p189 = por %p187, %p188
      %p190 = scmp.ne.s32.totalorder %s179, %s182
      %p191 = scmp.eq.s32.totalorder %s28, 1
      %p192 = por %p190, %p191
      %p193 = scmp.ne.s32.totalorder %s182, %s183
      %p194 = scmp.eq.s32.totalorder %s28, 0
      %p195 = por %p193, %p194
      %p196 = scmp.ne.s32.totalorder %s182, %s183
      %p197 = scmp.eq.s32.totalorder %s29, 1
      %p198 = por %p196, %p197
      %p200 = scmp.ne.s32.totalorder %s183, %s199
      %p201 = scmp.eq.s32.totalorder %s29, 0
      %p202 = por %p200, %p201
      %s204 = sadd.s32 %s203, 1
      %p207 = scmp.eq.s32.totalorder %s23, 1
      %p208 = scmp.ne.s32.totalorder %s203, %s205
      %p209 = scmp.eq.s32.totalorder %s23, 0
      %p210 = por %p208, %p209
      %p211 = scmp.ne.s32.totalorder %s203, %s205
      %p212 = scmp.eq.s32.totalorder %s28, 1
      %p213 = por %p211, %p212
      %p214 = scmp.ne.s32.totalorder %s205, %s206
      %p215 = scmp.eq.s32.totalorder %s28, 0
      %p216 = por %p214, %p215
      %p217 = scmp.ne.s32.totalorder %s205, %s206
      %p218 = scmp.eq.s32.totalorder %s29, 1
      %p219 = por %p217, %p218
      %p221 = scmp.ne.s32.totalorder %s206, %s220
      %p222 = scmp.eq.s32.totalorder %s29, 0
      %p223 = por %p221, %p222
      %s225 = sadd.s32 %s224, 1
      %p228 = scmp.eq.s32.totalorder %s23, 1
      %p229 = scmp.ne.s32.totalorder %s224, %s226
      %p230 = scmp.eq.s32.totalorder %s23, 0
      %p231 = por %p229, %p230
      %p232 = scmp.ne.s32.totalorder %s224, %s226
      %p233 = scmp.eq.s32.totalorder %s28, 1
      %p234 = por %p232, %p233
      %p235 = scmp.ne.s32.totalorder %s226, %s227
      %p236 = scmp.eq.s32.totalorder %s28, 0
      %p237 = por %p235, %p236
      %p238 = scmp.ne.s32.totalorder %s226, %s227
      %p239 = scmp.eq.s32.totalorder %s29, 1
      %p240 = por %p238, %p239
      %p242 = scmp.ne.s32.totalorder %s227, %s241
      %p243 = scmp.eq.s32.totalorder %s29, 0
      %p244 = por %p242, %p243
      %s246 = sadd.s32 %s245, 1
      %p249 = scmp.eq.s32.totalorder %s23, 1
      %p250 = scmp.ne.s32.totalorder %s245, %s247
      %p251 = scmp.eq.s32.totalorder %s23, 0
      %p252 = por %p250, %p251
      %p253 = scmp.ne.s32.totalorder %s245, %s247
      %p254 = scmp.eq.s32.totalorder %s28, 1
      %p255 = por %p253, %p254
      %p256 = scmp.ne.s32.totalorder %s247, %s248
      %p257 = scmp.eq.s32.totalorder %s28, 0
      %p258 = por %p256, %p257
      %p259 = scmp.ne.s32.totalorder %s247, %s248
      %p260 = scmp.eq.s32.totalorder %s29, 1
      %p261 = por %p259, %p260
      %p263 = scmp.ne.s32.totalorder %s248, %s262
      %p264 = scmp.eq.s32.totalorder %s29, 0
      %p265 = por %p263, %p264
      %p266 = scmp.le.s32.totalorder 1, %s23
      %p267 = scmp.lt.s32.totalorder %s23, 3
      %p268 = pnand %p266, %p267
      %p269 = pneg %p268
      // Predicated region
      $region9: #{tpu_custom_call.1} parent=5 // pred_check
        _
      $region10: #{tpu_custom_call.1} parent=5 // pred_check_branch
        %271 = sbr.rel (%p268) target = $region12
      $region11: #{tpu_custom_call.1} parent=5 // pred_region
        %s272 = ssub.s32 %s23, 1
        // Predicated region
        $region13: #{tpu_custom_call.1} parent=11 // pred_check
          %p273 = pneg %p44
        $region14: #{tpu_custom_call.1} parent=11 // pred_check_branch
          %275 = sbr.rel (%p273) target = $region16
        $region15: #{tpu_custom_call.1} parent=11 // pred_region
          _
        $region16: #{tpu_custom_call.1} parent=11 // pred_fallthru
          _
        // Predicated region
        $region17: #{tpu_custom_call.1} parent=11 // pred_check
          %p276 = pneg %p65
        $region18: #{tpu_custom_call.1} parent=11 // pred_check_branch
          %278 = sbr.rel (%p276) target = $region20
        $region19: #{tpu_custom_call.1} parent=11 // pred_region
          %280 = vsyncadd [#allocation3], 0
          %s281 = sshll.u32 %s1, 4
          %s282 = int_to_ptr.hbm [resolvable:$true] %s281
          %s283 = sshll.u32 [#allocation2], 4
          %s284 = int_to_ptr.vmem [resolvable:$true] %s283
          %289 = dma.hbm_to_vmem [thread:$0]  %s282, 512, %s284, [#allocation3], 128, 128, 8
        $region20: #{tpu_custom_call.1} parent=11 // pred_fallthru
          _
        // Predicated region
        $region21: #{tpu_custom_call.1} parent=11 // pred_check
          %p290 = pneg %p216
        $region22: #{tpu_custom_call.1} parent=11 // pred_check_branch
          %292 = sbr.rel (%p290) target = $region24
        $region23: #{tpu_custom_call.1} parent=11 // pred_region
          _
        $region24: #{tpu_custom_call.1} parent=11 // pred_fallthru
          _
        // Predicated region
        $region25: #{tpu_custom_call.1} parent=11 // pred_check
          %p293 = pneg %p237
        $region26: #{tpu_custom_call.1} parent=11 // pred_check_branch
          %295 = sbr.rel (%p293) target = $region28
        $region27: #{tpu_custom_call.1} parent=11 // pred_region
          %297 = vsyncadd [#allocation11], 0
          %s298 = sshll.u32 %s8, 4
          %s299 = int_to_ptr.hbm [resolvable:$true] %s298
          %s300 = sshll.u32 [#allocation10], 4
          %s301 = int_to_ptr.vmem [resolvable:$true] %s300
          %306 = dma.hbm_to_vmem [thread:$0]  %s299, 2048, %s301, [#allocation11], 128, 128, 8
        $region28: #{tpu_custom_call.1} parent=11 // pred_fallthru
          _
      $region12: #{tpu_custom_call.1} parent=5 // pred_fallthru
        _
      %p307 = scmp.lt.s32.totalorder %s23, 2
      // Predicated region
      $region29: #{tpu_custom_call.1} parent=5 // pred_check
        %p308 = pneg %p307
      $region30: #{tpu_custom_call.1} parent=5 // pred_check_branch
        %310 = sbr.rel (%p308) target = $region32
      $region31: #{tpu_custom_call.1} parent=5 // pred_region
        // Predicated region
        $region33: #{tpu_custom_call.1} parent=31 // pred_check
          %p311 = pneg %p85
        $region34: #{tpu_custom_call.1} parent=31 // pred_check_branch
          %313 = sbr.rel (%p311) target = $region36
        $region35: #{tpu_custom_call.1} parent=31 // pred_region
          %s314 = sand.u32 %s23, 1
          %s315 = scalar_lea.sflag [#allocation5], %s314
          %s316 = sand.u32 %s75, 1
          %s317 = smul.addr %s316, 128
          %s318 = scalar_lea.vmem [#allocation4], %s317
          %320 = vsyncadd %s315, 0
          %s321 = smul.addr %s23, 16
          %s322 = smul.addr %s321, 8
          %s323 = scalar_lea.hbm %s2, %s322
          %s324 = sshll.u32 %s323, 4
          %s325 = int_to_ptr.hbm [resolvable:$true] %s324
          %s326 = sshll.u32 %s318, 4
          %s327 = int_to_ptr.vmem [resolvable:$true] %s326
          %332 = dma.hbm_to_vmem [thread:$0]  %s325, 2048, %s327, %s315, 1024, 1024, 64
        $region36: #{tpu_custom_call.1} parent=31 // pred_fallthru
          _
        // Predicated region
        $region37: #{tpu_custom_call.1} parent=31 // pred_check
          %p333 = pneg %p111
        $region38: #{tpu_custom_call.1} parent=31 // pred_check_branch
          %335 = sbr.rel (%p333) target = $region40
        $region39: #{tpu_custom_call.1} parent=31 // pred_region
          %s336 = sand.u32 %s23, 1
          %s337 = scalar_lea.sflag [#allocation5], %s336
          %s338 = sand.u32 %s101, 1
          %s339 = smul.addr %s338, 128
          %s340 = scalar_lea.vmem [#allocation6], %s339
          %342 = vsyncadd %s337, 0
          %s343 = smul.addr %s23, 16
          %s344 = smul.addr %s343, 8
          %s345 = scalar_lea.hbm %s3, %s344
          %s346 = sshll.u32 %s345, 4
          %s347 = int_to_ptr.hbm [resolvable:$true] %s346
          %s348 = sshll.u32 %s340, 4
          %s349 = int_to_ptr.vmem [resolvable:$true] %s348
          %354 = dma.hbm_to_vmem [thread:$0]  %s347, 2048, %s349, %s337, 256, 256, 16
        $region40: #{tpu_custom_call.1} parent=31 // pred_fallthru
          _
        // Predicated region
        $region41: #{tpu_custom_call.1} parent=31 // pred_check
          %p355 = pneg %p137
        $region42: #{tpu_custom_call.1} parent=31 // pred_check_branch
          %357 = sbr.rel (%p355) target = $region44
        $region43: #{tpu_custom_call.1} parent=31 // pred_region
          %p358 = scmp.lt.s32.totalorder %s23, 1
          %s359 = scalar_select %p358, %s23, 1
          %s360 = smul.addr %s359, 8
          %s361 = smul.addr %s360, 8
          %s362 = scalar_lea.vmem %s4, %s361
        $region44: #{tpu_custom_call.1} parent=31 // pred_fallthru
          _
        // Predicated region
        $region45: #{tpu_custom_call.1} parent=31 // pred_check
          %p363 = pneg %p163
        $region46: #{tpu_custom_call.1} parent=31 // pred_check_branch
          %365 = sbr.rel (%p363) target = $region48
        $region47: #{tpu_custom_call.1} parent=31 // pred_region
          %s366 = sand.u32 %s23, 1
          %s367 = scalar_lea.sflag [#allocation8], %s366
          %s368 = sand.u32 %s153, 1
          %s369 = smul.addr %s368, 256
          %s370 = scalar_lea.vmem [#allocation7], %s369
          %372 = vsyncadd %s367, 0
          %s373 = smul.addr %s23, 32
          %s374 = smul.addr %s373, 8
          %s375 = scalar_lea.hbm %s5, %s374
          %s376 = sshll.u32 %s375, 4
          %s377 = int_to_ptr.hbm [resolvable:$true] %s376
          %s378 = sshll.u32 %s370, 4
          %s379 = int_to_ptr.vmem [resolvable:$true] %s378
          %384 = dma.hbm_to_vmem [thread:$0]  %s377, 4096, %s379, %s367, 256, 256, 16
        $region48: #{tpu_custom_call.1} parent=31 // pred_fallthru
          _
        // Predicated region
        $region49: #{tpu_custom_call.1} parent=31 // pred_check
          %p385 = pneg %p189
        $region50: #{tpu_custom_call.1} parent=31 // pred_check_branch
          %387 = sbr.rel (%p385) target = $region52
        $region51: #{tpu_custom_call.1} parent=31 // pred_region
          %s388 = sand.u32 %s23, 1
          %s389 = scalar_lea.sflag [#allocation8], %s388
          %s390 = sand.u32 %s179, 1
          %s391 = smul.addr %s390, 5
          %s392 = scalar_lea.vmem [#allocation9], %s391
          %394 = vsyncadd %s389, 0
          %s395 = smul.addr %s23, 5
          %s396 = scalar_lea.hbm %s6, %s395
          %s398 = sshll.u32 %s396, 4
          %s399 = int_to_ptr.hbm [resolvable:$true] %s398
          %s400 = sshll.u32 %s392, 4
          %s401 = int_to_ptr.vmem [resolvable:$true] %s400
          %403 = dma.hbm_to_vmem [thread:$0]  %s399, 80, %s401, %s389
        $region52: #{tpu_custom_call.1} parent=31 // pred_fallthru
          _
      $region32: #{tpu_custom_call.1} parent=5 // pred_fallthru
        _
      %p404 = scmp.le.s32.totalorder 1, %s23
      %p405 = scmp.lt.s32.totalorder %s23, 3
      %p406 = pnand %p404, %p405
      %p407 = pneg %p406
      // Predicated region
      $region53: #{tpu_custom_call.1} parent=5 // pred_check
        _
      $region54: #{tpu_custom_call.1} parent=5 // pred_check_branch
        %409 = sbr.rel (%p406) target = $region56
      $region55: #{tpu_custom_call.1} parent=5 // pred_region
        %s410 = ssub.s32 %s23, 1
        // Predicated region
        $region57: #{tpu_custom_call.1} parent=55 // pred_check
          %p411 = pneg %p65
        $region58: #{tpu_custom_call.1} parent=55 // pred_check_branch
          %413 = sbr.rel (%p411) target = $region60
        $region59: #{tpu_custom_call.1} parent=55 // pred_region
          %415 = dma.done [#allocation3], 512
        $region60: #{tpu_custom_call.1} parent=55 // pred_fallthru
          _
        %s416 = sand.u32 %s28, 1
        %s417 = scalar_lea.sflag [#allocation5], %s416
        %s418 = sand.u32 %s78, 1
        %s419 = smul.addr %s418, 128
        %s420 = scalar_lea.vmem [#allocation4], %s419
        // Predicated region
        $region61: #{tpu_custom_call.1} parent=55 // pred_check
          %p421 = pneg %p91
        $region62: #{tpu_custom_call.1} parent=55 // pred_check_branch
          %423 = sbr.rel (%p421) target = $region64
        $region63: #{tpu_custom_call.1} parent=55 // pred_region
          %425 = dma.done %s417, 2048
        $region64: #{tpu_custom_call.1} parent=55 // pred_fallthru
          _
        %s426 = sand.u32 %s28, 1
        %s427 = scalar_lea.sflag [#allocation5], %s426
        %s428 = sand.u32 %s104, 1
        %s429 = smul.addr %s428, 128
        %s430 = scalar_lea.vmem [#allocation6], %s429
        // Predicated region
        $region65: #{tpu_custom_call.1} parent=55 // pred_check
          %p431 = pneg %p117
        $region66: #{tpu_custom_call.1} parent=55 // pred_check_branch
          %433 = sbr.rel (%p431) target = $region68
        $region67: #{tpu_custom_call.1} parent=55 // pred_region
          %435 = dma.done %s427, 2048
        $region68: #{tpu_custom_call.1} parent=55 // pred_fallthru
          _
        %s436 = sand.u32 %s28, 1
        %s437 = scalar_lea.sflag [#allocation8], %s436
        %s438 = sand.u32 %s156, 1
        %s439 = smul.addr %s438, 256
        %s440 = scalar_lea.vmem [#allocation7], %s439
        // Predicated region
        $region69: #{tpu_custom_call.1} parent=55 // pred_check
          %p441 = pneg %p169
        $region70: #{tpu_custom_call.1} parent=55 // pred_check_branch
          %443 = sbr.rel (%p441) target = $region72
        $region71: #{tpu_custom_call.1} parent=55 // pred_region
          %445 = dma.done %s437, 4096
        $region72: #{tpu_custom_call.1} parent=55 // pred_fallthru
          _
        %s446 = sand.u32 %s28, 1
        %s447 = scalar_lea.sflag [#allocation8], %s446
        %s448 = sand.u32 %s182, 1
        %s449 = smul.addr %s448, 5
        %s450 = scalar_lea.vmem [#allocation9], %s449
        // Predicated region
        $region73: #{tpu_custom_call.1} parent=55 // pred_check
          %p451 = pneg %p195
        $region74: #{tpu_custom_call.1} parent=55 // pred_check_branch
          %453 = sbr.rel (%p451) target = $region76
        $region75: #{tpu_custom_call.1} parent=55 // pred_region
          %455 = dma.done %s447, 80
        $region76: #{tpu_custom_call.1} parent=55 // pred_fallthru
          _
        // Predicated region
        $region77: #{tpu_custom_call.1} parent=55 // pred_check
          %p456 = pneg %p237
        $region78: #{tpu_custom_call.1} parent=55 // pred_check_branch
          %458 = sbr.rel (%p456) target = $region80
        $region79: #{tpu_custom_call.1} parent=55 // pred_region
          %460 = dma.done [#allocation11], 2048
        $region80: #{tpu_custom_call.1} parent=55 // pred_fallthru
          _
        %p461 = pneg %p44
        %p462 = pneg %p41
        %p463 = pneg %p65
        %p464 = pneg %p62
        %s465 = sand.u32 %s28, 1
        %s466 = scalar_lea.sflag [#allocation5], %s465
        %s467 = sand.u32 %s78, 1
        %s468 = smul.addr %s467, 128
        %s469 = scalar_lea.vmem [#allocation4], %s468
        %p470 = pneg %p91
        %p471 = pneg %p88
        %s472 = sand.u32 %s28, 1
        %s473 = scalar_lea.sflag [#allocation5], %s472
        %s474 = sand.u32 %s104, 1
        %s475 = smul.addr %s474, 128
        %s476 = scalar_lea.vmem [#allocation6], %s475
        %p477 = pneg %p117
        %p478 = pneg %p114
        %p479 = scmp.lt.s32.totalorder %s28, 1
        %s480 = scalar_select %p479, %s28, 1
        %s481 = smul.addr %s480, 8
        %s482 = smul.addr %s481, 8
        %s483 = scalar_lea.vmem %s4, %s482
        %p484 = pneg %p143
        %p485 = pneg %p140
        %s486 = sand.u32 %s28, 1
        %s487 = scalar_lea.sflag [#allocation8], %s486
        %s488 = sand.u32 %s156, 1
        %s489 = smul.addr %s488, 256
        %s490 = scalar_lea.vmem [#allocation7], %s489
        %p491 = pneg %p169
        %p492 = pneg %p166
        %s493 = sand.u32 %s28, 1
        %s494 = scalar_lea.sflag [#allocation8], %s493
        %s495 = sand.u32 %s182, 1
        %s496 = smul.addr %s495, 5
        %s497 = scalar_lea.vmem [#allocation9], %s496
        %p498 = pneg %p195
        %p499 = pneg %p192
        %p500 = pneg %p216
        %p501 = pneg %p213
        %p502 = pneg %p237
        %p503 = pneg %p234
        %p504 = pneg %p258
        %p505 = pneg %p255
        %p506 = scmp.lt.s32.totalorder %s28, 1
        %s507 = scalar_select %p506, %s28, 1
        %s508 = smul.addr %s507, 8
        %s509 = smul.addr %s508, 8
        %s510 = scalar_lea.vmem %s4, %s509
        %p511 = scmp.eq.s32.totalorder %s28, 0
        // Predicated region
        $region81: #{tpu_custom_call.1} parent=55 // pred_check
          %p512 = pneg %p511
        $region82: #{tpu_custom_call.1} parent=55 // pred_check_branch
          %514 = sbr.rel (%p512) target = $region84
        $region83: #{tpu_custom_call.1} parent=55 // pred_region
          %vm515 = vcmask 31744
          %516 = vst.msk [vmem:[%s9] sm:$0xff] %vm515, 0.0
          %517 = vst.msk [vmem:[%s9 + $0x8] sm:$0xff] %vm515, 0.0
          %518 = vst.msk [vmem:[%s9 + $0x10] sm:$0xff] %vm515, 0.0
          %519 = vst.msk [vmem:[%s9 + $0x18] sm:$0xff] %vm515, 0.0
        $region84: #{tpu_custom_call.1} parent=55 // pred_fallthru
          _
        %v520 = vld [vmem:[%s0] sm:$0xff]
        %v521 = vld [vmem:[%s0 + $0x8] sm:$0xff]
        %v522 = vld [vmem:[%s0 + $0x10] sm:$0xff]
        %v523 = vld [vmem:[%s0 + $0x18] sm:$0xff]
        %v524 = vld [vmem:[%s0 + $0x20] sm:$0xff]
        %v525 = vld [vmem:[%s0 + $0x28] sm:$0xff]
        %v526 = vld [vmem:[%s0 + $0x30] sm:$0xff]
        %v527 = vld [vmem:[%s0 + $0x38] sm:$0xff]
        %v528 = vld [vmem:[#allocation2] sm:$0xff]
        %v529 = vld [vmem:[#allocation2 + $0x8] sm:$0xff]
        %v530 = vld [vmem:[%s430] sm:$0xff]
        %v531 = vld [vmem:[%s430 + $0x10] sm:$0xff]
        %v532 = vld [vmem:[%s430 + $0x20] sm:$0xff]
        %v533 = vld [vmem:[%s430 + $0x30] sm:$0xff]
        %v534 = vld [vmem:[%s430 + $0x40] sm:$0xff]
        %v535 = vld [vmem:[%s430 + $0x50] sm:$0xff]
        %v536 = vld [vmem:[%s430 + $0x60] sm:$0xff]
        %v537 = vld [vmem:[%s430 + $0x70] sm:$0xff]
        %538 = vxpose.xlu0.b32.start [1/16] %v520, 128
        %539 = vxpose.xlu0.b32.cont [2/16] %v521, 128
        %540 = vxpose.xlu0.b32.cont [3/16] %v522, 128
        %541 = vxpose.xlu0.b32.cont [4/16] %v523, 128
        %542 = vxpose.xlu0.b32.cont [5/16] %v524, 128
        %543 = vxpose.xlu0.b32.cont [6/16] %v525, 128
        %544 = vxpose.xlu0.b32.cont [7/16] %v526, 128
        %545 = vxpose.xlu0.b32.cont [8/16] %v527, 128
        %546 = vxpose.xlu0.b32.cont [9/16] 0.0, 128
        %547 = vxpose.xlu0.b32.cont [10/16] 0.0, 128
        %548 = vxpose.xlu0.b32.cont [11/16] 0.0, 128
        %549 = vxpose.xlu0.b32.cont [12/16] 0.0, 128
        %550 = vxpose.xlu0.b32.cont [13/16] 0.0, 128
        %551 = vxpose.xlu0.b32.cont [14/16] 0.0, 128
        %552 = vxpose.xlu0.b32.cont [15/16] 0.0, 128
        %553 = vxpose.xlu0.b32.end [16/16] 0.0, 128
        %v554 = vpop.trf.xlu0
        %v555 = vpop.trf.xlu0
        %v556 = vpop.trf.xlu0
        %v557 = vpop.trf.xlu0
        %v558 = vpop.trf.xlu0
        %v559 = vpop.trf.xlu0
        %v560 = vpop.trf.xlu0
        %v561 = vpop.trf.xlu0
        %v562 = vpop.trf.xlu0
        %v563 = vpop.trf.xlu0
        %v564 = vpop.trf.xlu0
        %v565 = vpop.trf.xlu0
        %v566 = vpop.trf.xlu0
        %v567 = vpop.trf.xlu0
        %v568 = vpop.trf.xlu0
        %v569 = vpop.trf.xlu0
        %vm570 = vcmask 523264
        %v572 = vsel %vm570, %v554, 0
        %574 = vmatpush.msra.mxu0 0.0
        %575 = vmatpush.msra.mxu0 0.0
        %576 = vmatpush.msra.mxu0 0.0
        %577 = vmatpush.msra.mxu0 0.0
        %578 = vmatpush.msra.mxu0 0.0
        %579 = vmatpush.msra.mxu0 0.0
        %580 = vmatpush.msra.mxu0 0.0
        %581 = vmatpush.msra.mxu0 0.0
        %582 = vmatpush.msra.mxu0 %v537
        %583 = vmatpush.msra.mxu0 %v536
        %584 = vmatpush.msra.mxu0 %v535
        %585 = vmatpush.msra.mxu0 %v534
        %586 = vmatpush.msra.mxu0 %v533
        %587 = vmatpush.msra.mxu0 %v532
        %588 = vmatpush.msra.mxu0 %v531
        %589 = vmatpush.msra.mxu0 %v530
        %590 = vmatmul.f32.gmra.mxu0 %v572
        %v591 = vpop.f32.mrf.mxu0
        %v592 = vadd.f32 0.0, %v591
        %593 = vdwg.mxu0
        %v594 = vld [vmem:[%s420] sm:$0xff]
        %v595 = vld [vmem:[%s420 + $0x40] sm:$0xff]
        %v597 = vsel %vm570, %v594, 0
        %v600 = vsel %vm570, %v595, 0
        %602 = vmatpush.msra.mxu0 0.0
        %603 = vmatpush.msra.mxu0 0.0
        %604 = vmatpush.msra.mxu0 0.0
        %605 = vmatpush.msra.mxu0 0.0
        %606 = vmatpush.msra.mxu0 0.0
        %607 = vmatpush.msra.mxu0 0.0
        %608 = vmatpush.msra.mxu0 0.0
        %609 = vmatpush.msra.mxu0 0.0
        %610 = vmatpush.msra.mxu0 %v527
        %611 = vmatpush.msra.mxu0 %v526
        %612 = vmatpush.msra.mxu0 %v525
        %613 = vmatpush.msra.mxu0 %v524
        %614 = vmatpush.msra.mxu0 %v523
        %615 = vmatpush.msra.mxu0 %v522
        %616 = vmatpush.msra.mxu0 %v521
        %617 = vmatpush.msra.mxu0 %v520
        %618 = vmatmul.f32.gmra.mxu0 %v597
        %v619 = vpop.f32.mrf.mxu0
        %v620 = vadd.f32 0.0, %v619
        %621 = vmatmul.f32.gmra.mxu0 %v600
        %v622 = vpop.f32.mrf.mxu0
        %v623 = vadd.f32 0.0, %v622
        %624 = vdwg.mxu0
        %v625 = vld [vmem:[%s420 + $0x28] sm:$0xff]
        %vm626 = vcmask 130048
        %v628 = vsel %vm626, %v592, 0
        %630 = vmatpush.msra.mxu0 0.0
        %631 = vmatpush.msra.mxu0 0.0
        %632 = vmatpush.msra.mxu0 0.0
        %633 = vmatpush.msra.mxu0 0.0
        %634 = vmatpush.msra.mxu0 0.0
        %635 = vmatpush.msra.mxu0 0.0
        %636 = vmatpush.msra.mxu0 0.0
        %637 = vmatpush.msra.mxu0 0.0
        %638 = vmatpush.msra.mxu0 0.0
        %639 = vmatpush.msra.mxu0 0.0
        %640 = vmatpush.msra.mxu0 0.0
        %641 = vmatpush.msra.mxu0 0.0
        %642 = vmatpush.msra.mxu0 0.0
        %643 = vmatpush.msra.mxu0 0.0
        %644 = vmatpush.msra.mxu0 %v623
        %645 = vmatpush.msra.mxu0 %v620
        %646 = vmatmul.f32.gmra.mxu0 %v628
        %v647 = vpop.f32.mrf.mxu0
        %v648 = vadd.f32 %v625, %v647
        %649 = vdwg.mxu0
        %v650 = vsub.f32 0.0, %v648
        %v651 = vmul.f32 %v650, 1.442695
        %v652 = vpow.pop %v651
        %v653 = vadd.f32 %v652, 1.0
        %v654 = vrcp.pop %v653
        %v655 = vld [vmem:[%s420 + $0x30] sm:$0xff]
        %vm656 = vcmask 64512
        %v658 = vsel %vm656, %v655, 0
        %660 = vmatpush.msra.mxu0 0.0
        %661 = vmatpush.msra.mxu0 0.0
        %662 = vmatpush.msra.mxu0 0.0
        %663 = vmatpush.msra.mxu0 0.0
        %664 = vmatpush.msra.mxu0 0.0
        %665 = vmatpush.msra.mxu0 0.0
        %666 = vmatpush.msra.mxu0 0.0
        %667 = vmatpush.msra.mxu0 0.0
        %668 = vmatpush.msra.mxu0 0.0
        %669 = vmatpush.msra.mxu0 0.0
        %670 = vmatpush.msra.mxu0 0.0
        %671 = vmatpush.msra.mxu0 0.0
        %672 = vmatpush.msra.mxu0 0.0
        %673 = vmatpush.msra.mxu0 0.0
        %674 = vmatpush.msra.mxu0 0.0
        %675 = vmatpush.msra.mxu0 %v654
        %676 = vmatmul.f32.gmra.mxu0 %v658
        %v677 = vpop.f32.mrf.mxu0
        %v678 = vadd.f32 0.0, %v677
        %679 = vdwg.mxu0
        %v680 = vsel %vm656, %v678, -inf
        %v681 = vrot.slane %v680, 4
        %v682 = vmax.f32 %v680, %v681
        %v683 = vrot.slane %v682, 2
        %v684 = vmax.f32 %v682, %v683
        %v685 = vrot.slane %v684, 1
        %v686 = vmax.f32 %v684, %v685
        %v687 = vsub.f32 %v678, %v686
        %v688 = vmul.f32 %v687, 1.442695
        %v689 = vpow.pop %v688
        %v690 = vsel %vm656, %v689, 0.0
        %v691 = vrot.slane %v690, 4
        %v692 = vadd.f32 %v690, %v691
        %v693 = vrot.slane %v692, 2
        %v694 = vadd.f32 %v692, %v693
        %v695 = vrot.slane %v694, 1
        %v696 = vadd.f32 %v694, %v695
        %v697 = vrcp.pop %v696
        %v698 = vmul.f32 %v689, %v697
        %v700 = vsel %vm656, %v520, 0
        %v703 = vsel %vm656, %v521, 0
        %v706 = vsel %vm656, %v522, 0
        %v709 = vsel %vm656, %v523, 0
        %v712 = vsel %vm656, %v524, 0
        %v715 = vsel %vm656, %v525, 0
        %v718 = vsel %vm656, %v526, 0
        %v721 = vsel %vm656, %v527, 0
        %723 = vmatpush.msra.mxu0 0.0
        %724 = vmatpush.msra.mxu0 0.0
        %725 = vmatpush.msra.mxu0 0.0
        %726 = vmatpush.msra.mxu0 0.0
        %727 = vmatpush.msra.mxu0 0.0
        %728 = vmatpush.msra.mxu0 0.0
        %729 = vmatpush.msra.mxu0 0.0
        %730 = vmatpush.msra.mxu0 0.0
        %731 = vmatpush.msra.mxu0 0.0
        %732 = vmatpush.msra.mxu0 0.0
        %733 = vmatpush.msra.mxu0 0.0
        %734 = vmatpush.msra.mxu0 0.0
        %735 = vmatpush.msra.mxu0 0.0
        %736 = vmatpush.msra.mxu0 0.0
        %737 = vmatpush.msra.mxu0 0.0
        %738 = vmatpush.msra.mxu0 %v698
        %739 = vmatmul.f32.gmra.mxu0 %v700
        %v740 = vpop.f32.mrf.mxu0
        %v741 = vadd.f32 0.0, %v740
        %742 = vmatmul.f32.gmra.mxu0 %v703
        %v743 = vpop.f32.mrf.mxu0
        %v744 = vadd.f32 0.0, %v743
        %745 = vmatmul.f32.gmra.mxu0 %v706
        %v746 = vpop.f32.mrf.mxu0
        %v747 = vadd.f32 0.0, %v746
        %748 = vmatmul.f32.gmra.mxu0 %v709
        %v749 = vpop.f32.mrf.mxu0
        %v750 = vadd.f32 0.0, %v749
        %751 = vmatmul.f32.gmra.mxu0 %v712
        %v752 = vpop.f32.mrf.mxu0
        %v753 = vadd.f32 0.0, %v752
        %754 = vmatmul.f32.gmra.mxu0 %v715
        %v755 = vpop.f32.mrf.mxu0
        %v756 = vadd.f32 0.0, %v755
        %757 = vmatmul.f32.gmra.mxu0 %v718
        %v758 = vpop.f32.mrf.mxu0
        %v759 = vadd.f32 0.0, %v758
        %760 = vmatmul.f32.gmra.mxu0 %v721
        %v761 = vpop.f32.mrf.mxu0
        %v762 = vadd.f32 0.0, %v761
        %763 = vdwg.mxu0
        %v764 = vld [vmem:[%s450] sm:$0x1]
        %v766 = vperm.slane %v764, 0
        %v768 = vmul.f32 %v741, %v766
        %v769 = vmul.f32 %v744, %v766
        %v770 = vmul.f32 %v747, %v766
        %v771 = vmul.f32 %v750, %v766
        %v772 = vmul.f32 %v753, %v766
        %v773 = vmul.f32 %v756, %v766
        %v774 = vmul.f32 %v759, %v766
        %v775 = vmul.f32 %v762, %v766
        %v776 = vsel %vm656, %v768, 0.0
        %777 = vadd.xlane.f32.xlu0 %v776
        %v778 = vpop.xlane.xlu0 %777
        %v779 = vsel %vm656, %v769, 0.0
        %780 = vadd.xlane.f32.xlu0 %v779
        %v781 = vpop.xlane.xlu0 %780
        %v782 = vsel %vm656, %v770, 0.0
        %783 = vadd.xlane.f32.xlu0 %v782
        %v784 = vpop.xlane.xlu0 %783
        %v785 = vsel %vm656, %v771, 0.0
        %786 = vadd.xlane.f32.xlu0 %v785
        %v787 = vpop.xlane.xlu0 %786
        %v788 = vsel %vm656, %v772, 0.0
        %789 = vadd.xlane.f32.xlu0 %v788
        %v790 = vpop.xlane.xlu0 %789
        %v791 = vsel %vm656, %v773, 0.0
        %792 = vadd.xlane.f32.xlu0 %v791
        %v793 = vpop.xlane.xlu0 %792
        %v794 = vsel %vm656, %v774, 0.0
        %795 = vadd.xlane.f32.xlu0 %v794
        %v796 = vpop.xlane.xlu0 %795
        %v797 = vsel %vm656, %v775, 0.0
        %798 = vadd.xlane.f32.xlu0 %v797
        %v799 = vpop.xlane.xlu0 %798
        %v800 = vld [vmem:[%s7] sm:$0xff]
        %v801 = vld [vmem:[%s7 + $0x8] sm:$0xff]
        %v802 = vld [vmem:[%s430 + $0x8] sm:$0xff]
        %v803 = vld [vmem:[%s430 + $0x18] sm:$0xff]
        %v804 = vld [vmem:[%s430 + $0x28] sm:$0xff]
        %v805 = vld [vmem:[%s430 + $0x38] sm:$0xff]
        %v806 = vld [vmem:[%s430 + $0x48] sm:$0xff]
        %v807 = vld [vmem:[%s430 + $0x58] sm:$0xff]
        %v808 = vld [vmem:[%s430 + $0x68] sm:$0xff]
        %v809 = vld [vmem:[%s430 + $0x78] sm:$0xff]
        %v810 = vmul.f32 %v778, %v802
        %v811 = vmul.f32 %v781, %v803
        %v812 = vmul.f32 %v784, %v804
        %v813 = vmul.f32 %v787, %v805
        %v814 = vmul.f32 %v790, %v806
        %v815 = vmul.f32 %v793, %v807
        %v816 = vmul.f32 %v796, %v808
        %v817 = vmul.f32 %v799, %v809
        %v819 = vsel %vm570, %v800, 0
        %v822 = vsel %vm570, %v801, 0
        %824 = vmatpush.msra.mxu0 0.0
        %825 = vmatpush.msra.mxu0 0.0
        %826 = vmatpush.msra.mxu0 0.0
        %827 = vmatpush.msra.mxu0 0.0
        %828 = vmatpush.msra.mxu0 0.0
        %829 = vmatpush.msra.mxu0 0.0
        %830 = vmatpush.msra.mxu0 0.0
        %831 = vmatpush.msra.mxu0 0.0
        %832 = vmatpush.msra.mxu0 %v817
        %833 = vmatpush.msra.mxu0 %v816
        %834 = vmatpush.msra.mxu0 %v815
        %835 = vmatpush.msra.mxu0 %v814
        %836 = vmatpush.msra.mxu0 %v813
        %837 = vmatpush.msra.mxu0 %v812
        %838 = vmatpush.msra.mxu0 %v811
        %839 = vmatpush.msra.mxu0 %v810
        %840 = vmatmul.f32.gmra.mxu0 %v819
        %v841 = vpop.f32.mrf.mxu0
        %v842 = vadd.f32 0.0, %v841
        %843 = vmatmul.f32.gmra.mxu0 %v822
        %v844 = vpop.f32.mrf.mxu0
        %v845 = vadd.f32 0.0, %v844
        %846 = vdwg.mxu0
        %v847 = vld [vmem:[%s420 + $0x8] sm:$0xff]
        %v848 = vld [vmem:[%s420 + $0x48] sm:$0xff]
        %v850 = vsel %vm570, %v847, 0
        %v853 = vsel %vm570, %v848, 0
        %855 = vmatpush.msra.mxu0 0.0
        %856 = vmatpush.msra.mxu0 0.0
        %857 = vmatpush.msra.mxu0 0.0
        %858 = vmatpush.msra.mxu0 0.0
        %859 = vmatpush.msra.mxu0 0.0
        %860 = vmatpush.msra.mxu0 0.0
        %861 = vmatpush.msra.mxu0 0.0
        %862 = vmatpush.msra.mxu0 0.0
        %863 = vmatpush.msra.mxu0 %v762
        %864 = vmatpush.msra.mxu0 %v759
        %865 = vmatpush.msra.mxu0 %v756
        %866 = vmatpush.msra.mxu0 %v753
        %867 = vmatpush.msra.mxu0 %v750
        %868 = vmatpush.msra.mxu0 %v747
        %869 = vmatpush.msra.mxu0 %v744
        %870 = vmatpush.msra.mxu0 %v741
        %871 = vmatmul.f32.gmra.mxu0 %v850
        %v872 = vpop.f32.mrf.mxu0
        %v873 = vadd.f32 0.0, %v872
        %874 = vmatmul.f32.gmra.mxu0 %v853
        %v875 = vpop.f32.mrf.mxu0
        %v876 = vadd.f32 0.0, %v875
        %877 = vdwg.mxu0
        %v878 = vld [vmem:[%s420 + $0x10] sm:$0xff]
        %v879 = vld [vmem:[%s420 + $0x50] sm:$0xff]
        %v881 = vsel %vm656, %v842, 0
        %v884 = vsel %vm656, %v845, 0
        %v887 = vsel %vm656, %v873, 0
        %v890 = vsel %vm656, %v876, 0
        %892 = vmatpush.xpose.msra.mxu0 0.0
        %893 = vmatpush.xpose.msra.mxu0 0.0
        %894 = vmatpush.xpose.msra.mxu0 0.0
        %895 = vmatpush.xpose.msra.mxu0 0.0
        %896 = vmatpush.xpose.msra.mxu0 0.0
        %897 = vmatpush.xpose.msra.mxu0 0.0
        %898 = vmatpush.xpose.msra.mxu0 0.0
        %899 = vmatpush.xpose.msra.mxu0 0.0
        %900 = vmatpush.xpose.msra.mxu0 0.0
        %901 = vmatpush.xpose.msra.mxu0 0.0
        %902 = vmatpush.xpose.msra.mxu0 0.0
        %903 = vmatpush.xpose.msra.mxu0 0.0
        %904 = vmatpush.xpose.msra.mxu0 0.0
        %905 = vmatpush.xpose.msra.mxu0 0.0
        %906 = vmatpush.xpose.msra.mxu0 %v890
        %907 = vmatpush.xpose.msra.mxu0 %v887
        %908 = vmatmul.f32.gmra.mxu0 %v881
        %v909 = vpop.f32.mrf.mxu0
        %v910 = vadd.f32 %v878, %v909
        %911 = vmatmul.f32.gmra.mxu0 %v884
        %v912 = vpop.f32.mrf.mxu0
        %v913 = vadd.f32 %v879, %v912
        %914 = vdwg.mxu0
        %v915 = vsub.f32 0.0, %v910
        %v916 = vsub.f32 0.0, %v913
        %v917 = vmul.f32 %v915, 1.442695
        %v918 = vpow.pop %v917
        %v919 = vmul.f32 %v916, 1.442695
        %v920 = vpow.pop %v919
        %v921 = vadd.f32 %v918, 1.0
        %v922 = vadd.f32 %v920, 1.0
        %v923 = vrcp.pop %v921
        %v924 = vrcp.pop %v922
        %v925 = vld [vmem:[%s420 + $0x18] sm:$0xff]
        %v926 = vld [vmem:[%s420 + $0x58] sm:$0xff]
        %v928 = vsel %vm626, %v925, 0
        %v931 = vsel %vm626, %v926, 0
        %933 = vmatpush.msra.mxu0 0.0
        %934 = vmatpush.msra.mxu0 0.0
        %935 = vmatpush.msra.mxu0 0.0
        %936 = vmatpush.msra.mxu0 0.0
        %937 = vmatpush.msra.mxu0 0.0
        %938 = vmatpush.msra.mxu0 0.0
        %939 = vmatpush.msra.mxu0 0.0
        %940 = vmatpush.msra.mxu0 0.0
        %941 = vmatpush.msra.mxu0 0.0
        %942 = vmatpush.msra.mxu0 0.0
        %943 = vmatpush.msra.mxu0 0.0
        %944 = vmatpush.msra.mxu0 0.0
        %945 = vmatpush.msra.mxu0 0.0
        %946 = vmatpush.msra.mxu0 0.0
        %947 = vmatpush.msra.mxu0 %v924
        %948 = vmatpush.msra.mxu0 %v923
        %949 = vmatmul.f32.gmra.mxu0 %v928
        %v950 = vpop.f32.mrf.mxu0
        %v951 = vadd.f32 0.0, %v950
        %952 = vmatmul.f32.gmra.mxu0 %v931
        %v953 = vpop.f32.mrf.mxu0
        %v954 = vadd.f32 0.0, %v953
        %955 = vdwg.mxu0
        %v956 = vsel %vm626, %v951, -inf
        %v957 = vsel %vm626, %v954, -inf
        %v958 = vmax.f32 %v956, %v957
        %v959 = vrot.slane %v958, 4
        %v960 = vmax.f32 %v958, %v959
        %v961 = vrot.slane %v960, 2
        %v962 = vmax.f32 %v960, %v961
        %v963 = vrot.slane %v962, 1
        %v964 = vmax.f32 %v962, %v963
        %v965 = vsub.f32 %v951, %v964
        %v966 = vsub.f32 %v954, %v964
        %v967 = vmul.f32 %v965, 1.442695
        %v968 = vpow.pop %v967
        %v969 = vmul.f32 %v966, 1.442695
        %v970 = vpow.pop %v969
        %v971 = vsel %vm626, %v968, 0.0
        %v972 = vsel %vm626, %v970, 0.0
        %v973 = vadd.f32 %v971, %v972
        %v974 = vrot.slane %v973, 4
        %v975 = vadd.f32 %v973, %v974
        %v976 = vrot.slane %v975, 2
        %v977 = vadd.f32 %v975, %v976
        %v978 = vrot.slane %v977, 1
        %v979 = vadd.f32 %v977, %v978
        %v980 = vrcp.pop %v979
        %v981 = vmul.f32 %v968, %v980
        %v982 = vmul.f32 %v970, %v980
        %v983 = vld [vmem:[%s420 + $0x20] sm:$0xff]
        %v984 = vld [vmem:[%s420 + $0x60] sm:$0xff]
        %v985 = vmul.f32 %v981, %v983
        %v986 = vmul.f32 %v982, %v984
        %v988 = vsel %vm626, %v985, 0
        %v991 = vsel %vm626, %v986, 0
        %993 = vmatpush.msra.mxu0 0.0
        %994 = vmatpush.msra.mxu0 0.0
        %995 = vmatpush.msra.mxu0 0.0
        %996 = vmatpush.msra.mxu0 0.0
        %997 = vmatpush.msra.mxu0 0.0
        %998 = vmatpush.msra.mxu0 0.0
        %999 = vmatpush.msra.mxu0 0.0
        %1000 = vmatpush.msra.mxu0 0.0
        %1001 = vmatpush.msra.mxu0 0.0
        %1002 = vmatpush.msra.mxu0 0.0
        %1003 = vmatpush.msra.mxu0 0.0
        %1004 = vmatpush.msra.mxu0 0.0
        %1005 = vmatpush.msra.mxu0 0.0
        %1006 = vmatpush.msra.mxu0 0.0
        %1007 = vmatpush.msra.mxu0 %v529
        %1008 = vmatpush.msra.mxu0 %v528
        %1009 = vmatmul.f32.gmra.mxu0 %v988
        %v1010 = vpop.f32.mrf.mxu0
        %v1011 = vadd.f32 0.0, %v1010
        %1012 = vmatmul.f32.gmra.mxu0 %v991
        %v1013 = vpop.f32.mrf.mxu0
        %v1014 = vadd.f32 0.0, %v1013
        %1015 = vdwg.mxu0
        %v1016 = vld [vmem:[%s510] sm:$0xff]
        %v1017 = vld [vmem:[%s510 + $0x10] sm:$0xff]
        %v1018 = vld [vmem:[%s510 + $0x20] sm:$0xff]
        %v1019 = vld [vmem:[%s510 + $0x30] sm:$0xff]
        %vm1020 = vcmask 261120
        %v1022 = vsel %vm1020, %v1011, 0
        %v1025 = vsel %vm1020, %v1014, 0
        %1027 = vmatpush.msra.mxu0 0.0
        %1028 = vmatpush.msra.mxu0 0.0
        %1029 = vmatpush.msra.mxu0 0.0
        %1030 = vmatpush.msra.mxu0 0.0
        %1031 = vmatpush.msra.mxu0 0.0
        %1032 = vmatpush.msra.mxu0 0.0
        %1033 = vmatpush.msra.mxu0 0.0
        %1034 = vmatpush.msra.mxu0 0.0
        %1035 = vmatpush.msra.mxu0 0.0
        %1036 = vmatpush.msra.mxu0 0.0
        %1037 = vmatpush.msra.mxu0 0.0
        %1038 = vmatpush.msra.mxu0 0.0
        %1039 = vmatpush.msra.mxu0 %v1019
        %1040 = vmatpush.msra.mxu0 %v1018
        %1041 = vmatpush.msra.mxu0 %v1017
        %1042 = vmatpush.msra.mxu0 %v1016
        %1043 = vmatmul.f32.gmra.mxu0 %v1022
        %v1044 = vpop.f32.mrf.mxu0
        %v1045 = vadd.f32 0.0, %v1044
        %1046 = vmatmul.f32.gmra.mxu0 %v1025
        %v1047 = vpop.f32.mrf.mxu0
        %v1048 = vadd.f32 0.0, %v1047
        %1049 = vdwg.mxu0
        %v1050 = vmax.f32 %v1045, 0.0
        %v1051 = vmax.f32 %v1048, 0.0
        %v1052 = vld [vmem:[%s440] sm:$0xff]
        %v1053 = vld [vmem:[%s440 + $0x10] sm:$0xff]
        %v1054 = vld [vmem:[%s440 + $0x20] sm:$0xff]
        %v1055 = vld [vmem:[%s440 + $0x30] sm:$0xff]
        %v1056 = vld [vmem:[%s440 + $0x40] sm:$0xff]
        %v1057 = vld [vmem:[%s440 + $0x50] sm:$0xff]
        %v1058 = vld [vmem:[%s440 + $0x60] sm:$0xff]
        %v1059 = vld [vmem:[%s440 + $0x70] sm:$0xff]
        %v1060 = vld [vmem:[%s440 + $0x80] sm:$0xff]
        %v1061 = vld [vmem:[%s440 + $0x90] sm:$0xff]
        %v1062 = vld [vmem:[%s440 + $0xa0] sm:$0xff]
        %v1063 = vld [vmem:[%s440 + $0xb0] sm:$0xff]
        %v1064 = vld [vmem:[%s440 + $0xc0] sm:$0xff]
        %v1065 = vld [vmem:[%s440 + $0xd0] sm:$0xff]
        %v1066 = vld [vmem:[%s440 + $0xe0] sm:$0xff]
        %v1067 = vld [vmem:[%s440 + $0xf0] sm:$0xff]
        %v1068 = vld [vmem:[%s510 + $0x8] sm:$0xff]
        %v1069 = vld [vmem:[%s510 + $0x18] sm:$0xff]
        %v1070 = vld [vmem:[%s510 + $0x28] sm:$0xff]
        %v1071 = vld [vmem:[%s510 + $0x38] sm:$0xff]
        %v1073 = vsel %vm1020, %v528, 0
        %v1076 = vsel %vm1020, %v529, 0
        %1078 = vmatpush.msra.mxu0 0.0
        %1079 = vmatpush.msra.mxu0 0.0
        %1080 = vmatpush.msra.mxu0 0.0
        %1081 = vmatpush.msra.mxu0 0.0
        %1082 = vmatpush.msra.mxu0 0.0
        %1083 = vmatpush.msra.mxu0 0.0
        %1084 = vmatpush.msra.mxu0 0.0
        %1085 = vmatpush.msra.mxu0 0.0
        %1086 = vmatpush.msra.mxu0 0.0
        %1087 = vmatpush.msra.mxu0 0.0
        %1088 = vmatpush.msra.mxu0 0.0
        %1089 = vmatpush.msra.mxu0 0.0
        %1090 = vmatpush.msra.mxu0 %v1071
        %1091 = vmatpush.msra.mxu0 %v1070
        %1092 = vmatpush.msra.mxu0 %v1069
        %1093 = vmatpush.msra.mxu0 %v1068
        %1094 = vmatmul.f32.gmra.mxu0 %v1073
        %v1095 = vpop.f32.mrf.mxu0
        %v1096 = vadd.f32 0.0, %v1095
        %1097 = vmatmul.f32.gmra.mxu0 %v1076
        %v1098 = vpop.f32.mrf.mxu0
        %v1099 = vadd.f32 0.0, %v1098
        %1100 = vdwg.mxu0
        %1101 = vmatpush.msra.mxu0 %v1067
        %1102 = vmatpush.msra.mxu0 %v1066
        %1103 = vmatpush.msra.mxu0 %v1065
        %1104 = vmatpush.msra.mxu0 %v1064
        %1105 = vmatpush.msra.mxu0 %v1063
        %1106 = vmatpush.msra.mxu0 %v1062
        %1107 = vmatpush.msra.mxu0 %v1061
        %1108 = vmatpush.msra.mxu0 %v1060
        %1109 = vmatpush.msra.mxu0 %v1059
        %1110 = vmatpush.msra.mxu0 %v1058
        %1111 = vmatpush.msra.mxu0 %v1057
        %1112 = vmatpush.msra.mxu0 %v1056
        %1113 = vmatpush.msra.mxu0 %v1055
        %1114 = vmatpush.msra.mxu0 %v1054
        %1115 = vmatpush.msra.mxu0 %v1053
        %1116 = vmatpush.msra.mxu0 %v1052
        %1117 = vmatmul.f32.gmra.mxu0 %v1050
        %v1118 = vpop.f32.mrf.mxu0
        %v1119 = vadd.f32 %v1096, %v1118
        %1120 = vmatmul.f32.gmra.mxu0 %v1051
        %v1121 = vpop.f32.mrf.mxu0
        %v1122 = vadd.f32 %v1099, %v1121
        %1123 = vdwg.mxu0
        %v1124 = vld [vmem:[%s450 + $0x1] sm:$0x1]
        %v1126 = vperm.slane %v1124, 0
        %v1128 = vadd.f32 %v1119, %v1126
        %v1129 = vadd.f32 %v1122, %v1126
        %v1130 = vmax.f32 %v1128, 0.0
        %v1131 = vmax.f32 %v1129, 0.0
        %v1132 = vld [vmem:[#allocation10] sm:$0xff]
        %v1133 = vld [vmem:[#allocation10 + $0x8] sm:$0xff]
        %v1134 = vld [vmem:[#allocation10 + $0x10] sm:$0xff]
        %v1135 = vld [vmem:[#allocation10 + $0x18] sm:$0xff]
        %v1136 = vld [vmem:[#allocation10 + $0x20] sm:$0xff]
        %v1137 = vld [vmem:[#allocation10 + $0x28] sm:$0xff]
        %v1138 = vld [vmem:[#allocation10 + $0x30] sm:$0xff]
        %v1139 = vld [vmem:[#allocation10 + $0x38] sm:$0xff]
        %v1140 = vld [vmem:[#allocation10 + $0x40] sm:$0xff]
        %v1141 = vld [vmem:[#allocation10 + $0x48] sm:$0xff]
        %v1142 = vld [vmem:[#allocation10 + $0x50] sm:$0xff]
        %v1143 = vld [vmem:[#allocation10 + $0x58] sm:$0xff]
        %v1144 = vld [vmem:[#allocation10 + $0x60] sm:$0xff]
        %v1145 = vld [vmem:[#allocation10 + $0x68] sm:$0xff]
        %v1146 = vld [vmem:[#allocation10 + $0x70] sm:$0xff]
        %v1147 = vld [vmem:[#allocation10 + $0x78] sm:$0xff]
        %1148 = vmatpush.msra.mxu0 %v1147
        %1149 = vmatpush.msra.mxu0 %v1146
        %1150 = vmatpush.msra.mxu0 %v1145
        %1151 = vmatpush.msra.mxu0 %v1144
        %1152 = vmatpush.msra.mxu0 %v1143
        %1153 = vmatpush.msra.mxu0 %v1142
        %1154 = vmatpush.msra.mxu0 %v1141
        %1155 = vmatpush.msra.mxu0 %v1140
        %1156 = vmatpush.msra.mxu0 %v1139
        %1157 = vmatpush.msra.mxu0 %v1138
        %1158 = vmatpush.msra.mxu0 %v1137
        %1159 = vmatpush.msra.mxu0 %v1136
        %1160 = vmatpush.msra.mxu0 %v1135
        %1161 = vmatpush.msra.mxu0 %v1134
        %1162 = vmatpush.msra.mxu0 %v1133
        %1163 = vmatpush.msra.mxu0 %v1132
        %1164 = vmatmul.f32.gmra.mxu0 %v1130
        %v1165 = vpop.f32.mrf.mxu0
        %v1166 = vadd.f32 0.0, %v1165
        %1167 = vmatmul.f32.gmra.mxu0 %v1131
        %v1168 = vpop.f32.mrf.mxu0
        %v1169 = vadd.f32 0.0, %v1168
        %1170 = vdwg.mxu0
        %v1171 = vsub.f32 %v1130, %v1166
        %v1172 = vsub.f32 %v1131, %v1169
        %v1173 = vmul.f32 %v1171, %v1171
        %v1174 = vmul.f32 %v1172, %v1172
        %1175 = vmatpush.msra.mxu0 %v1147
        %1176 = vmatpush.msra.mxu0 %v1146
        %1177 = vmatpush.msra.mxu0 %v1145
        %1178 = vmatpush.msra.mxu0 %v1144
        %1179 = vmatpush.msra.mxu0 %v1143
        %1180 = vmatpush.msra.mxu0 %v1142
        %1181 = vmatpush.msra.mxu0 %v1141
        %1182 = vmatpush.msra.mxu0 %v1140
        %1183 = vmatpush.msra.mxu0 %v1139
        %1184 = vmatpush.msra.mxu0 %v1138
        %1185 = vmatpush.msra.mxu0 %v1137
        %1186 = vmatpush.msra.mxu0 %v1136
        %1187 = vmatpush.msra.mxu0 %v1135
        %1188 = vmatpush.msra.mxu0 %v1134
        %1189 = vmatpush.msra.mxu0 %v1133
        %1190 = vmatpush.msra.mxu0 %v1132
        %1191 = vmatmul.f32.gmra.mxu0 %v1173
        %v1192 = vpop.f32.mrf.mxu0
        %v1193 = vadd.f32 1e-05, %v1192
        %1194 = vmatmul.f32.gmra.mxu0 %v1174
        %v1195 = vpop.f32.mrf.mxu0
        %v1196 = vadd.f32 1e-05, %v1195
        %1197 = vdwg.mxu0
        %v1198 = vrsqrt.pop %v1193
        %v1199 = vmul.f32 %v1198, %v1193
        %v1200 = vmul.f32 %v1199, %v1198
        %v1201 = vmul.f32 0.5, %v1200
        %v1202 = vsub.f32 1.5, %v1201
        %v1203 = vmul.f32 %v1198, %v1202
        %vm1204 = vweird.f32 %v1193
        %vm1205 = vweird.f32 %v1198
        %vm1206 = vmor %vm1204, %vm1205
        %v1207 = vsel %vm1206, %v1198, %v1203
        %v1208 = vrsqrt.pop %v1196
        %v1209 = vmul.f32 %v1208, %v1196
        %v1210 = vmul.f32 %v1209, %v1208
        %v1211 = vmul.f32 0.5, %v1210
        %v1212 = vsub.f32 1.5, %v1211
        %v1213 = vmul.f32 %v1208, %v1212
        %vm1214 = vweird.f32 %v1196
        %vm1215 = vweird.f32 %v1208
        %vm1216 = vmor %vm1214, %vm1215
        %v1217 = vsel %vm1216, %v1208, %v1213
        %v1218 = vmul.f32 %v1171, %v1207
        %v1219 = vmul.f32 %v1172, %v1217
        %v1220 = vld [vmem:[%s450 + $0x2] sm:$0x1]
        %v1222 = vperm.slane %v1220, 0
        %v1224 = vmul.f32 %v1218, %v1222
        %v1225 = vmul.f32 %v1219, %v1222
        %v1226 = vld [vmem:[%s450 + $0x3] sm:$0x1]
        %v1228 = vperm.slane %v1226, 0
        %v1230 = vadd.f32 %v1224, %v1228
        %v1231 = vadd.f32 %v1225, %v1228
        %v1232 = vld [vmem:[%s440 + $0x8] sm:$0xff]
        %v1233 = vld [vmem:[%s440 + $0x18] sm:$0xff]
        %v1234 = vld [vmem:[%s440 + $0x28] sm:$0xff]
        %v1235 = vld [vmem:[%s440 + $0x38] sm:$0xff]
        %v1236 = vld [vmem:[%s440 + $0x48] sm:$0xff]
        %v1237 = vld [vmem:[%s440 + $0x58] sm:$0xff]
        %v1238 = vld [vmem:[%s440 + $0x68] sm:$0xff]
        %v1239 = vld [vmem:[%s440 + $0x78] sm:$0xff]
        %v1240 = vld [vmem:[%s440 + $0x88] sm:$0xff]
        %v1241 = vld [vmem:[%s440 + $0x98] sm:$0xff]
        %v1242 = vld [vmem:[%s440 + $0xa8] sm:$0xff]
        %v1243 = vld [vmem:[%s440 + $0xb8] sm:$0xff]
        %v1244 = vld [vmem:[%s440 + $0xc8] sm:$0xff]
        %v1245 = vld [vmem:[%s440 + $0xd8] sm:$0xff]
        %v1246 = vld [vmem:[%s440 + $0xe8] sm:$0xff]
        %v1247 = vld [vmem:[%s440 + $0xf8] sm:$0xff]
        %v1248 = vld [vmem:[%s450 + $0x4] sm:$0x1]
        %v1250 = vperm.slane %v1248, 0
        %1252 = vmatpush.msra.mxu0 %v1247
        %1253 = vmatpush.msra.mxu0 %v1246
        %1254 = vmatpush.msra.mxu0 %v1245
        %1255 = vmatpush.msra.mxu0 %v1244
        %1256 = vmatpush.msra.mxu0 %v1243
        %1257 = vmatpush.msra.mxu0 %v1242
        %1258 = vmatpush.msra.mxu0 %v1241
        %1259 = vmatpush.msra.mxu0 %v1240
        %1260 = vmatpush.msra.mxu0 %v1239
        %1261 = vmatpush.msra.mxu0 %v1238
        %1262 = vmatpush.msra.mxu0 %v1237
        %1263 = vmatpush.msra.mxu0 %v1236
        %1264 = vmatpush.msra.mxu0 %v1235
        %1265 = vmatpush.msra.mxu0 %v1234
        %1266 = vmatpush.msra.mxu0 %v1233
        %1267 = vmatpush.msra.mxu0 %v1232
        %1268 = vmatmul.f32.gmra.mxu0 %v1230
        %v1269 = vpop.f32.mrf.mxu0
        %v1270 = vadd.f32 %v1250, %v1269
        %1271 = vmatmul.f32.gmra.mxu0 %v1231
        %v1272 = vpop.f32.mrf.mxu0
        %v1273 = vadd.f32 %v1250, %v1272
        %1274 = vdwg.mxu0
        %v1275 = vld [vmem:[%s9] sm:$0xff]
        %v1276 = vld [vmem:[%s9 + $0x8] sm:$0xff]
        %v1277 = vld [vmem:[%s420 + $0x38] sm:$0xff]
        %v1278 = vld [vmem:[%s420 + $0x78] sm:$0xff]
        %v1279 = vmul.f32 %v1270, %v1277
        %v1280 = vmul.f32 %v1273, %v1278
        %v1281 = vadd.f32 %v1275, %v1279
        %v1282 = vadd.f32 %v1276, %v1280
        %vm1283 = vcmask 31744
        %1284 = vst.msk [vmem:[%s9] sm:$0xff] %vm1283, %v1281
        %1285 = vst.msk [vmem:[%s9 + $0x8] sm:$0xff] %vm1283, %v1282
        %s1286 = scalar_lea.vmem %s0, 64
        %v1287 = vld [vmem:[%s1286] sm:$0xff]
        %v1288 = vld [vmem:[%s1286 + $0x8] sm:$0xff]
        %v1289 = vld [vmem:[%s1286 + $0x10] sm:$0xff]
        %v1290 = vld [vmem:[%s1286 + $0x18] sm:$0xff]
        %v1291 = vld [vmem:[%s1286 + $0x20] sm:$0xff]
        %v1292 = vld [vmem:[%s1286 + $0x28] sm:$0xff]
        %v1293 = vld [vmem:[%s1286 + $0x30] sm:$0xff]
        %v1294 = vld [vmem:[%s1286 + $0x38] sm:$0xff]
        %s1295 = scalar_lea.vmem [#allocation2], 16
        %v1296 = vld [vmem:[%s1295] sm:$0xff]
        %v1297 = vld [vmem:[%s1295 + $0x8] sm:$0xff]
        %v1298 = vld [vmem:[%s430] sm:$0xff]
        %v1299 = vld [vmem:[%s430 + $0x10] sm:$0xff]
        %v1300 = vld [vmem:[%s430 + $0x20] sm:$0xff]
        %v1301 = vld [vmem:[%s430 + $0x30] sm:$0xff]
        %v1302 = vld [vmem:[%s430 + $0x40] sm:$0xff]
        %v1303 = vld [vmem:[%s430 + $0x50] sm:$0xff]
        %v1304 = vld [vmem:[%s430 + $0x60] sm:$0xff]
        %v1305 = vld [vmem:[%s430 + $0x70] sm:$0xff]
        %1306 = vxpose.xlu0.b32.start [1/16] %v1287, 128
        %1307 = vxpose.xlu0.b32.cont [2/16] %v1288, 128
        %1308 = vxpose.xlu0.b32.cont [3/16] %v1289, 128
        %1309 = vxpose.xlu0.b32.cont [4/16] %v1290, 128
        %1310 = vxpose.xlu0.b32.cont [5/16] %v1291, 128
        %1311 = vxpose.xlu0.b32.cont [6/16] %v1292, 128
        %1312 = vxpose.xlu0.b32.cont [7/16] %v1293, 128
        %1313 = vxpose.xlu0.b32.cont [8/16] %v1294, 128
        %1314 = vxpose.xlu0.b32.cont [9/16] 0.0, 128
        %1315 = vxpose.xlu0.b32.cont [10/16] 0.0, 128
        %1316 = vxpose.xlu0.b32.cont [11/16] 0.0, 128
        %1317 = vxpose.xlu0.b32.cont [12/16] 0.0, 128
        %1318 = vxpose.xlu0.b32.cont [13/16] 0.0, 128
        %1319 = vxpose.xlu0.b32.cont [14/16] 0.0, 128
        %1320 = vxpose.xlu0.b32.cont [15/16] 0.0, 128
        %1321 = vxpose.xlu0.b32.end [16/16] 0.0, 128
        %v1322 = vpop.trf.xlu0
        %v1323 = vpop.trf.xlu0
        %v1324 = vpop.trf.xlu0
        %v1325 = vpop.trf.xlu0
        %v1326 = vpop.trf.xlu0
        %v1327 = vpop.trf.xlu0
        %v1328 = vpop.trf.xlu0
        %v1329 = vpop.trf.xlu0
        %v1330 = vpop.trf.xlu0
        %v1331 = vpop.trf.xlu0
        %v1332 = vpop.trf.xlu0
        %v1333 = vpop.trf.xlu0
        %v1334 = vpop.trf.xlu0
        %v1335 = vpop.trf.xlu0
        %v1336 = vpop.trf.xlu0
        %v1337 = vpop.trf.xlu0
        %v1339 = vsel %vm570, %v1322, 0
        %1341 = vmatpush.msra.mxu0 0.0
        %1342 = vmatpush.msra.mxu0 0.0
        %1343 = vmatpush.msra.mxu0 0.0
        %1344 = vmatpush.msra.mxu0 0.0
        %1345 = vmatpush.msra.mxu0 0.0
        %1346 = vmatpush.msra.mxu0 0.0
        %1347 = vmatpush.msra.mxu0 0.0
        %1348 = vmatpush.msra.mxu0 0.0
        %1349 = vmatpush.msra.mxu0 %v1305
        %1350 = vmatpush.msra.mxu0 %v1304
        %1351 = vmatpush.msra.mxu0 %v1303
        %1352 = vmatpush.msra.mxu0 %v1302
        %1353 = vmatpush.msra.mxu0 %v1301
        %1354 = vmatpush.msra.mxu0 %v1300
        %1355 = vmatpush.msra.mxu0 %v1299
        %1356 = vmatpush.msra.mxu0 %v1298
        %1357 = vmatmul.f32.gmra.mxu0 %v1339
        %v1358 = vpop.f32.mrf.mxu0
        %v1359 = vadd.f32 0.0, %v1358
        %1360 = vdwg.mxu0
        %v1361 = vld [vmem:[%s420] sm:$0xff]
        %v1362 = vld [vmem:[%s420 + $0x40] sm:$0xff]
        %v1364 = vsel %vm570, %v1361, 0
        %v1367 = vsel %vm570, %v1362, 0
        %1369 = vmatpush.msra.mxu0 0.0
        %1370 = vmatpush.msra.mxu0 0.0
        %1371 = vmatpush.msra.mxu0 0.0
        %1372 = vmatpush.msra.mxu0 0.0
        %1373 = vmatpush.msra.mxu0 0.0
        %1374 = vmatpush.msra.mxu0 0.0
        %1375 = vmatpush.msra.mxu0 0.0
        %1376 = vmatpush.msra.mxu0 0.0
        %1377 = vmatpush.msra.mxu0 %v1294
        %1378 = vmatpush.msra.mxu0 %v1293
        %1379 = vmatpush.msra.mxu0 %v1292
        %1380 = vmatpush.msra.mxu0 %v1291
        %1381 = vmatpush.msra.mxu0 %v1290
        %1382 = vmatpush.msra.mxu0 %v1289
        %1383 = vmatpush.msra.mxu0 %v1288
        %1384 = vmatpush.msra.mxu0 %v1287
        %1385 = vmatmul.f32.gmra.mxu0 %v1364
        %v1386 = vpop.f32.mrf.mxu0
        %v1387 = vadd.f32 0.0, %v1386
        %1388 = vmatmul.f32.gmra.mxu0 %v1367
        %v1389 = vpop.f32.mrf.mxu0
        %v1390 = vadd.f32 0.0, %v1389
        %1391 = vdwg.mxu0
        %v1392 = vld [vmem:[%s420 + $0x28] sm:$0xff]
        %v1394 = vsel %vm626, %v1359, 0
        %1396 = vmatpush.msra.mxu0 0.0
        %1397 = vmatpush.msra.mxu0 0.0
        %1398 = vmatpush.msra.mxu0 0.0
        %1399 = vmatpush.msra.mxu0 0.0
        %1400 = vmatpush.msra.mxu0 0.0
        %1401 = vmatpush.msra.mxu0 0.0
        %1402 = vmatpush.msra.mxu0 0.0
        %1403 = vmatpush.msra.mxu0 0.0
        %1404 = vmatpush.msra.mxu0 0.0
        %1405 = vmatpush.msra.mxu0 0.0
        %1406 = vmatpush.msra.mxu0 0.0
        %1407 = vmatpush.msra.mxu0 0.0
        %1408 = vmatpush.msra.mxu0 0.0
        %1409 = vmatpush.msra.mxu0 0.0
        %1410 = vmatpush.msra.mxu0 %v1390
        %1411 = vmatpush.msra.mxu0 %v1387
        %1412 = vmatmul.f32.gmra.mxu0 %v1394
        %v1413 = vpop.f32.mrf.mxu0
        %v1414 = vadd.f32 %v1392, %v1413
        %1415 = vdwg.mxu0
        %v1416 = vsub.f32 0.0, %v1414
        %v1417 = vmul.f32 %v1416, 1.442695
        %v1418 = vpow.pop %v1417
        %v1419 = vadd.f32 %v1418, 1.0
        %v1420 = vrcp.pop %v1419
        %v1421 = vld [vmem:[%s420 + $0x30] sm:$0xff]
        %v1423 = vsel %vm656, %v1421, 0
        %1425 = vmatpush.msra.mxu0 0.0
        %1426 = vmatpush.msra.mxu0 0.0
        %1427 = vmatpush.msra.mxu0 0.0
        %1428 = vmatpush.msra.mxu0 0.0
        %1429 = vmatpush.msra.mxu0 0.0
        %1430 = vmatpush.msra.mxu0 0.0
        %1431 = vmatpush.msra.mxu0 0.0
        %1432 = vmatpush.msra.mxu0 0.0
        %1433 = vmatpush.msra.mxu0 0.0
        %1434 = vmatpush.msra.mxu0 0.0
        %1435 = vmatpush.msra.mxu0 0.0
        %1436 = vmatpush.msra.mxu0 0.0
        %1437 = vmatpush.msra.mxu0 0.0
        %1438 = vmatpush.msra.mxu0 0.0
        %1439 = vmatpush.msra.mxu0 0.0
        %1440 = vmatpush.msra.mxu0 %v1420
        %1441 = vmatmul.f32.gmra.mxu0 %v1423
        %v1442 = vpop.f32.mrf.mxu0
        %v1443 = vadd.f32 0.0, %v1442
        %1444 = vdwg.mxu0
        %v1445 = vsel %vm656, %v1443, -inf
        %v1446 = vrot.slane %v1445, 4
        %v1447 = vmax.f32 %v1445, %v1446
        %v1448 = vrot.slane %v1447, 2
        %v1449 = vmax.f32 %v1447, %v1448
        %v1450 = vrot.slane %v1449, 1
        %v1451 = vmax.f32 %v1449, %v1450
        %v1452 = vsub.f32 %v1443, %v1451
        %v1453 = vmul.f32 %v1452, 1.442695
        %v1454 = vpow.pop %v1453
        %v1455 = vsel %vm656, %v1454, 0.0
        %v1456 = vrot.slane %v1455, 4
        %v1457 = vadd.f32 %v1455, %v1456
        %v1458 = vrot.slane %v1457, 2
        %v1459 = vadd.f32 %v1457, %v1458
        %v1460 = vrot.slane %v1459, 1
        %v1461 = vadd.f32 %v1459, %v1460
        %v1462 = vrcp.pop %v1461
        %v1463 = vmul.f32 %v1454, %v1462
        %v1465 = vsel %vm656, %v1287, 0
        %v1468 = vsel %vm656, %v1288, 0
        %v1471 = vsel %vm656, %v1289, 0
        %v1474 = vsel %vm656, %v1290, 0
        %v1477 = vsel %vm656, %v1291, 0
        %v1480 = vsel %vm656, %v1292, 0
        %v1483 = vsel %vm656, %v1293, 0
        %v1486 = vsel %vm656, %v1294, 0
        %1488 = vmatpush.msra.mxu0 0.0
        %1489 = vmatpush.msra.mxu0 0.0
        %1490 = vmatpush.msra.mxu0 0.0
        %1491 = vmatpush.msra.mxu0 0.0
        %1492 = vmatpush.msra.mxu0 0.0
        %1493 = vmatpush.msra.mxu0 0.0
        %1494 = vmatpush.msra.mxu0 0.0
        %1495 = vmatpush.msra.mxu0 0.0
        %1496 = vmatpush.msra.mxu0 0.0
        %1497 = vmatpush.msra.mxu0 0.0
        %1498 = vmatpush.msra.mxu0 0.0
        %1499 = vmatpush.msra.mxu0 0.0
        %1500 = vmatpush.msra.mxu0 0.0
        %1501 = vmatpush.msra.mxu0 0.0
        %1502 = vmatpush.msra.mxu0 0.0
        %1503 = vmatpush.msra.mxu0 %v1463
        %1504 = vmatmul.f32.gmra.mxu0 %v1465
        %v1505 = vpop.f32.mrf.mxu0
        %v1506 = vadd.f32 0.0, %v1505
        %1507 = vmatmul.f32.gmra.mxu0 %v1468
        %v1508 = vpop.f32.mrf.mxu0
        %v1509 = vadd.f32 0.0, %v1508
        %1510 = vmatmul.f32.gmra.mxu0 %v1471
        %v1511 = vpop.f32.mrf.mxu0
        %v1512 = vadd.f32 0.0, %v1511
        %1513 = vmatmul.f32.gmra.mxu0 %v1474
        %v1514 = vpop.f32.mrf.mxu0
        %v1515 = vadd.f32 0.0, %v1514
        %1516 = vmatmul.f32.gmra.mxu0 %v1477
        %v1517 = vpop.f32.mrf.mxu0
        %v1518 = vadd.f32 0.0, %v1517
        %1519 = vmatmul.f32.gmra.mxu0 %v1480
        %v1520 = vpop.f32.mrf.mxu0
        %v1521 = vadd.f32 0.0, %v1520
        %1522 = vmatmul.f32.gmra.mxu0 %v1483
        %v1523 = vpop.f32.mrf.mxu0
        %v1524 = vadd.f32 0.0, %v1523
        %1525 = vmatmul.f32.gmra.mxu0 %v1486
        %v1526 = vpop.f32.mrf.mxu0
        %v1527 = vadd.f32 0.0, %v1526
        %1528 = vdwg.mxu0
        %v1529 = vld [vmem:[%s450] sm:$0x1]
        %v1531 = vperm.slane %v1529, 0
        %v1533 = vmul.f32 %v1506, %v1531
        %v1534 = vmul.f32 %v1509, %v1531
        %v1535 = vmul.f32 %v1512, %v1531
        %v1536 = vmul.f32 %v1515, %v1531
        %v1537 = vmul.f32 %v1518, %v1531
        %v1538 = vmul.f32 %v1521, %v1531
        %v1539 = vmul.f32 %v1524, %v1531
        %v1540 = vmul.f32 %v1527, %v1531
        %v1541 = vsel %vm656, %v1533, 0.0
        %1542 = vadd.xlane.f32.xlu0 %v1541
        %v1543 = vpop.xlane.xlu0 %1542
        %v1544 = vsel %vm656, %v1534, 0.0
        %1545 = vadd.xlane.f32.xlu0 %v1544
        %v1546 = vpop.xlane.xlu0 %1545
        %v1547 = vsel %vm656, %v1535, 0.0
        %1548 = vadd.xlane.f32.xlu0 %v1547
        %v1549 = vpop.xlane.xlu0 %1548
        %v1550 = vsel %vm656, %v1536, 0.0
        %1551 = vadd.xlane.f32.xlu0 %v1550
        %v1552 = vpop.xlane.xlu0 %1551
        %v1553 = vsel %vm656, %v1537, 0.0
        %1554 = vadd.xlane.f32.xlu0 %v1553
        %v1555 = vpop.xlane.xlu0 %1554
        %v1556 = vsel %vm656, %v1538, 0.0
        %1557 = vadd.xlane.f32.xlu0 %v1556
        %v1558 = vpop.xlane.xlu0 %1557
        %v1559 = vsel %vm656, %v1539, 0.0
        %1560 = vadd.xlane.f32.xlu0 %v1559
        %v1561 = vpop.xlane.xlu0 %1560
        %v1562 = vsel %vm656, %v1540, 0.0
        %1563 = vadd.xlane.f32.xlu0 %v1562
        %v1564 = vpop.xlane.xlu0 %1563
        %v1565 = vld [vmem:[%s7] sm:$0xff]
        %v1566 = vld [vmem:[%s7 + $0x8] sm:$0xff]
        %v1567 = vld [vmem:[%s430 + $0x8] sm:$0xff]
        %v1568 = vld [vmem:[%s430 + $0x18] sm:$0xff]
        %v1569 = vld [vmem:[%s430 + $0x28] sm:$0xff]
        %v1570 = vld [vmem:[%s430 + $0x38] sm:$0xff]
        %v1571 = vld [vmem:[%s430 + $0x48] sm:$0xff]
        %v1572 = vld [vmem:[%s430 + $0x58] sm:$0xff]
        %v1573 = vld [vmem:[%s430 + $0x68] sm:$0xff]
        %v1574 = vld [vmem:[%s430 + $0x78] sm:$0xff]
        %v1575 = vmul.f32 %v1543, %v1567
        %v1576 = vmul.f32 %v1546, %v1568
        %v1577 = vmul.f32 %v1549, %v1569
        %v1578 = vmul.f32 %v1552, %v1570
        %v1579 = vmul.f32 %v1555, %v1571
        %v1580 = vmul.f32 %v1558, %v1572
        %v1581 = vmul.f32 %v1561, %v1573
        %v1582 = vmul.f32 %v1564, %v1574
        %v1584 = vsel %vm570, %v1565, 0
        %v1587 = vsel %vm570, %v1566, 0
        %1589 = vmatpush.msra.mxu0 0.0
        %1590 = vmatpush.msra.mxu0 0.0
        %1591 = vmatpush.msra.mxu0 0.0
        %1592 = vmatpush.msra.mxu0 0.0
        %1593 = vmatpush.msra.mxu0 0.0
        %1594 = vmatpush.msra.mxu0 0.0
        %1595 = vmatpush.msra.mxu0 0.0
        %1596 = vmatpush.msra.mxu0 0.0
        %1597 = vmatpush.msra.mxu0 %v1582
        %1598 = vmatpush.msra.mxu0 %v1581
        %1599 = vmatpush.msra.mxu0 %v1580
        %1600 = vmatpush.msra.mxu0 %v1579
        %1601 = vmatpush.msra.mxu0 %v1578
        %1602 = vmatpush.msra.mxu0 %v1577
        %1603 = vmatpush.msra.mxu0 %v1576
        %1604 = vmatpush.msra.mxu0 %v1575
        %1605 = vmatmul.f32.gmra.mxu0 %v1584
        %v1606 = vpop.f32.mrf.mxu0
        %v1607 = vadd.f32 0.0, %v1606
        %1608 = vmatmul.f32.gmra.mxu0 %v1587
        %v1609 = vpop.f32.mrf.mxu0
        %v1610 = vadd.f32 0.0, %v1609
        %1611 = vdwg.mxu0
        %v1612 = vld [vmem:[%s420 + $0x8] sm:$0xff]
        %v1613 = vld [vmem:[%s420 + $0x48] sm:$0xff]
        %v1615 = vsel %vm570, %v1612, 0
        %v1618 = vsel %vm570, %v1613, 0
        %1620 = vmatpush.msra.mxu0 0.0
        %1621 = vmatpush.msra.mxu0 0.0
        %1622 = vmatpush.msra.mxu0 0.0
        %1623 = vmatpush.msra.mxu0 0.0
        %1624 = vmatpush.msra.mxu0 0.0
        %1625 = vmatpush.msra.mxu0 0.0
        %1626 = vmatpush.msra.mxu0 0.0
        %1627 = vmatpush.msra.mxu0 0.0
        %1628 = vmatpush.msra.mxu0 %v1527
        %1629 = vmatpush.msra.mxu0 %v1524
        %1630 = vmatpush.msra.mxu0 %v1521
        %1631 = vmatpush.msra.mxu0 %v1518
        %1632 = vmatpush.msra.mxu0 %v1515
        %1633 = vmatpush.msra.mxu0 %v1512
        %1634 = vmatpush.msra.mxu0 %v1509
        %1635 = vmatpush.msra.mxu0 %v1506
        %1636 = vmatmul.f32.gmra.mxu0 %v1615
        %v1637 = vpop.f32.mrf.mxu0
        %v1638 = vadd.f32 0.0, %v1637
        %1639 = vmatmul.f32.gmra.mxu0 %v1618
        %v1640 = vpop.f32.mrf.mxu0
        %v1641 = vadd.f32 0.0, %v1640
        %1642 = vdwg.mxu0
        %v1643 = vld [vmem:[%s420 + $0x10] sm:$0xff]
        %v1644 = vld [vmem:[%s420 + $0x50] sm:$0xff]
        %v1646 = vsel %vm656, %v1607, 0
        %v1649 = vsel %vm656, %v1610, 0
        %v1652 = vsel %vm656, %v1638, 0
        %v1655 = vsel %vm656, %v1641, 0
        %1657 = vmatpush.xpose.msra.mxu0 0.0
        %1658 = vmatpush.xpose.msra.mxu0 0.0
        %1659 = vmatpush.xpose.msra.mxu0 0.0
        %1660 = vmatpush.xpose.msra.mxu0 0.0
        %1661 = vmatpush.xpose.msra.mxu0 0.0
        %1662 = vmatpush.xpose.msra.mxu0 0.0
        %1663 = vmatpush.xpose.msra.mxu0 0.0
        %1664 = vmatpush.xpose.msra.mxu0 0.0
        %1665 = vmatpush.xpose.msra.mxu0 0.0
        %1666 = vmatpush.xpose.msra.mxu0 0.0
        %1667 = vmatpush.xpose.msra.mxu0 0.0
        %1668 = vmatpush.xpose.msra.mxu0 0.0
        %1669 = vmatpush.xpose.msra.mxu0 0.0
        %1670 = vmatpush.xpose.msra.mxu0 0.0
        %1671 = vmatpush.xpose.msra.mxu0 %v1655
        %1672 = vmatpush.xpose.msra.mxu0 %v1652
        %1673 = vmatmul.f32.gmra.mxu0 %v1646
        %v1674 = vpop.f32.mrf.mxu0
        %v1675 = vadd.f32 %v1643, %v1674
        %1676 = vmatmul.f32.gmra.mxu0 %v1649
        %v1677 = vpop.f32.mrf.mxu0
        %v1678 = vadd.f32 %v1644, %v1677
        %1679 = vdwg.mxu0
        %v1680 = vsub.f32 0.0, %v1675
        %v1681 = vsub.f32 0.0, %v1678
        %v1682 = vmul.f32 %v1680, 1.442695
        %v1683 = vpow.pop %v1682
        %v1684 = vmul.f32 %v1681, 1.442695
        %v1685 = vpow.pop %v1684
        %v1686 = vadd.f32 %v1683, 1.0
        %v1687 = vadd.f32 %v1685, 1.0
        %v1688 = vrcp.pop %v1686
        %v1689 = vrcp.pop %v1687
        %v1690 = vld [vmem:[%s420 + $0x18] sm:$0xff]
        %v1691 = vld [vmem:[%s420 + $0x58] sm:$0xff]
        %v1693 = vsel %vm626, %v1690, 0
        %v1696 = vsel %vm626, %v1691, 0
        %1698 = vmatpush.msra.mxu0 0.0
        %1699 = vmatpush.msra.mxu0 0.0
        %1700 = vmatpush.msra.mxu0 0.0
        %1701 = vmatpush.msra.mxu0 0.0
        %1702 = vmatpush.msra.mxu0 0.0
        %1703 = vmatpush.msra.mxu0 0.0
        %1704 = vmatpush.msra.mxu0 0.0
        %1705 = vmatpush.msra.mxu0 0.0
        %1706 = vmatpush.msra.mxu0 0.0
        %1707 = vmatpush.msra.mxu0 0.0
        %1708 = vmatpush.msra.mxu0 0.0
        %1709 = vmatpush.msra.mxu0 0.0
        %1710 = vmatpush.msra.mxu0 0.0
        %1711 = vmatpush.msra.mxu0 0.0
        %1712 = vmatpush.msra.mxu0 %v1689
        %1713 = vmatpush.msra.mxu0 %v1688
        %1714 = vmatmul.f32.gmra.mxu0 %v1693
        %v1715 = vpop.f32.mrf.mxu0
        %v1716 = vadd.f32 0.0, %v1715
        %1717 = vmatmul.f32.gmra.mxu0 %v1696
        %v1718 = vpop.f32.mrf.mxu0
        %v1719 = vadd.f32 0.0, %v1718
        %1720 = vdwg.mxu0
        %v1721 = vsel %vm626, %v1716, -inf
        %v1722 = vsel %vm626, %v1719, -inf
        %v1723 = vmax.f32 %v1721, %v1722
        %v1724 = vrot.slane %v1723, 4
        %v1725 = vmax.f32 %v1723, %v1724
        %v1726 = vrot.slane %v1725, 2
        %v1727 = vmax.f32 %v1725, %v1726
        %v1728 = vrot.slane %v1727, 1
        %v1729 = vmax.f32 %v1727, %v1728
        %v1730 = vsub.f32 %v1716, %v1729
        %v1731 = vsub.f32 %v1719, %v1729
        %v1732 = vmul.f32 %v1730, 1.442695
        %v1733 = vpow.pop %v1732
        %v1734 = vmul.f32 %v1731, 1.442695
        %v1735 = vpow.pop %v1734
        %v1736 = vsel %vm626, %v1733, 0.0
        %v1737 = vsel %vm626, %v1735, 0.0
        %v1738 = vadd.f32 %v1736, %v1737
        %v1739 = vrot.slane %v1738, 4
        %v1740 = vadd.f32 %v1738, %v1739
        %v1741 = vrot.slane %v1740, 2
        %v1742 = vadd.f32 %v1740, %v1741
        %v1743 = vrot.slane %v1742, 1
        %v1744 = vadd.f32 %v1742, %v1743
        %v1745 = vrcp.pop %v1744
        %v1746 = vmul.f32 %v1733, %v1745
        %v1747 = vmul.f32 %v1735, %v1745
        %v1748 = vld [vmem:[%s420 + $0x20] sm:$0xff]
        %v1749 = vld [vmem:[%s420 + $0x60] sm:$0xff]
        %v1750 = vmul.f32 %v1746, %v1748
        %v1751 = vmul.f32 %v1747, %v1749
        %v1753 = vsel %vm626, %v1750, 0
        %v1756 = vsel %vm626, %v1751, 0
        %1758 = vmatpush.msra.mxu0 0.0
        %1759 = vmatpush.msra.mxu0 0.0
        %1760 = vmatpush.msra.mxu0 0.0
        %1761 = vmatpush.msra.mxu0 0.0
        %1762 = vmatpush.msra.mxu0 0.0
        %1763 = vmatpush.msra.mxu0 0.0
        %1764 = vmatpush.msra.mxu0 0.0
        %1765 = vmatpush.msra.mxu0 0.0
        %1766 = vmatpush.msra.mxu0 0.0
        %1767 = vmatpush.msra.mxu0 0.0
        %1768 = vmatpush.msra.mxu0 0.0
        %1769 = vmatpush.msra.mxu0 0.0
        %1770 = vmatpush.msra.mxu0 0.0
        %1771 = vmatpush.msra.mxu0 0.0
        %1772 = vmatpush.msra.mxu0 %v1297
        %1773 = vmatpush.msra.mxu0 %v1296
        %1774 = vmatmul.f32.gmra.mxu0 %v1753
        %v1775 = vpop.f32.mrf.mxu0
        %v1776 = vadd.f32 0.0, %v1775
        %1777 = vmatmul.f32.gmra.mxu0 %v1756
        %v1778 = vpop.f32.mrf.mxu0
        %v1779 = vadd.f32 0.0, %v1778
        %1780 = vdwg.mxu0
        %v1781 = vld [vmem:[%s510] sm:$0xff]
        %v1782 = vld [vmem:[%s510 + $0x10] sm:$0xff]
        %v1783 = vld [vmem:[%s510 + $0x20] sm:$0xff]
        %v1784 = vld [vmem:[%s510 + $0x30] sm:$0xff]
        %v1786 = vsel %vm1020, %v1776, 0
        %v1789 = vsel %vm1020, %v1779, 0
        %1791 = vmatpush.msra.mxu0 0.0
        %1792 = vmatpush.msra.mxu0 0.0
        %1793 = vmatpush.msra.mxu0 0.0
        %1794 = vmatpush.msra.mxu0 0.0
        %1795 = vmatpush.msra.mxu0 0.0
        %1796 = vmatpush.msra.mxu0 0.0
        %1797 = vmatpush.msra.mxu0 0.0
        %1798 = vmatpush.msra.mxu0 0.0
        %1799 = vmatpush.msra.mxu0 0.0
        %1800 = vmatpush.msra.mxu0 0.0
        %1801 = vmatpush.msra.mxu0 0.0
        %1802 = vmatpush.msra.mxu0 0.0
        %1803 = vmatpush.msra.mxu0 %v1784
        %1804 = vmatpush.msra.mxu0 %v1783
        %1805 = vmatpush.msra.mxu0 %v1782
        %1806 = vmatpush.msra.mxu0 %v1781
        %1807 = vmatmul.f32.gmra.mxu0 %v1786
        %v1808 = vpop.f32.mrf.mxu0
        %v1809 = vadd.f32 0.0, %v1808
        %1810 = vmatmul.f32.gmra.mxu0 %v1789
        %v1811 = vpop.f32.mrf.mxu0
        %v1812 = vadd.f32 0.0, %v1811
        %1813 = vdwg.mxu0
        %v1814 = vmax.f32 %v1809, 0.0
        %v1815 = vmax.f32 %v1812, 0.0
        %v1816 = vld [vmem:[%s440] sm:$0xff]
        %v1817 = vld [vmem:[%s440 + $0x10] sm:$0xff]
        %v1818 = vld [vmem:[%s440 + $0x20] sm:$0xff]
        %v1819 = vld [vmem:[%s440 + $0x30] sm:$0xff]
        %v1820 = vld [vmem:[%s440 + $0x40] sm:$0xff]
        %v1821 = vld [vmem:[%s440 + $0x50] sm:$0xff]
        %v1822 = vld [vmem:[%s440 + $0x60] sm:$0xff]
        %v1823 = vld [vmem:[%s440 + $0x70] sm:$0xff]
        %v1824 = vld [vmem:[%s440 + $0x80] sm:$0xff]
        %v1825 = vld [vmem:[%s440 + $0x90] sm:$0xff]
        %v1826 = vld [vmem:[%s440 + $0xa0] sm:$0xff]
        %v1827 = vld [vmem:[%s440 + $0xb0] sm:$0xff]
        %v1828 = vld [vmem:[%s440 + $0xc0] sm:$0xff]
        %v1829 = vld [vmem:[%s440 + $0xd0] sm:$0xff]
        %v1830 = vld [vmem:[%s440 + $0xe0] sm:$0xff]
        %v1831 = vld [vmem:[%s440 + $0xf0] sm:$0xff]
        %v1832 = vld [vmem:[%s510 + $0x8] sm:$0xff]
        %v1833 = vld [vmem:[%s510 + $0x18] sm:$0xff]
        %v1834 = vld [vmem:[%s510 + $0x28] sm:$0xff]
        %v1835 = vld [vmem:[%s510 + $0x38] sm:$0xff]
        %v1837 = vsel %vm1020, %v1296, 0
        %v1840 = vsel %vm1020, %v1297, 0
        %1842 = vmatpush.msra.mxu0 0.0
        %1843 = vmatpush.msra.mxu0 0.0
        %1844 = vmatpush.msra.mxu0 0.0
        %1845 = vmatpush.msra.mxu0 0.0
        %1846 = vmatpush.msra.mxu0 0.0
        %1847 = vmatpush.msra.mxu0 0.0
        %1848 = vmatpush.msra.mxu0 0.0
        %1849 = vmatpush.msra.mxu0 0.0
        %1850 = vmatpush.msra.mxu0 0.0
        %1851 = vmatpush.msra.mxu0 0.0
        %1852 = vmatpush.msra.mxu0 0.0
        %1853 = vmatpush.msra.mxu0 0.0
        %1854 = vmatpush.msra.mxu0 %v1835
        %1855 = vmatpush.msra.mxu0 %v1834
        %1856 = vmatpush.msra.mxu0 %v1833
        %1857 = vmatpush.msra.mxu0 %v1832
        %1858 = vmatmul.f32.gmra.mxu0 %v1837
        %v1859 = vpop.f32.mrf.mxu0
        %v1860 = vadd.f32 0.0, %v1859
        %1861 = vmatmul.f32.gmra.mxu0 %v1840
        %v1862 = vpop.f32.mrf.mxu0
        %v1863 = vadd.f32 0.0, %v1862
        %1864 = vdwg.mxu0
        %1865 = vmatpush.msra.mxu0 %v1831
        %1866 = vmatpush.msra.mxu0 %v1830
        %1867 = vmatpush.msra.mxu0 %v1829
        %1868 = vmatpush.msra.mxu0 %v1828
        %1869 = vmatpush.msra.mxu0 %v1827
        %1870 = vmatpush.msra.mxu0 %v1826
        %1871 = vmatpush.msra.mxu0 %v1825
        %1872 = vmatpush.msra.mxu0 %v1824
        %1873 = vmatpush.msra.mxu0 %v1823
        %1874 = vmatpush.msra.mxu0 %v1822
        %1875 = vmatpush.msra.mxu0 %v1821
        %1876 = vmatpush.msra.mxu0 %v1820
        %1877 = vmatpush.msra.mxu0 %v1819
        %1878 = vmatpush.msra.mxu0 %v1818
        %1879 = vmatpush.msra.mxu0 %v1817
        %1880 = vmatpush.msra.mxu0 %v1816
        %1881 = vmatmul.f32.gmra.mxu0 %v1814
        %v1882 = vpop.f32.mrf.mxu0
        %v1883 = vadd.f32 %v1860, %v1882
        %1884 = vmatmul.f32.gmra.mxu0 %v1815
        %v1885 = vpop.f32.mrf.mxu0
        %v1886 = vadd.f32 %v1863, %v1885
        %1887 = vdwg.mxu0
        %v1888 = vld [vmem:[%s450 + $0x1] sm:$0x1]
        %v1890 = vperm.slane %v1888, 0
        %v1892 = vadd.f32 %v1883, %v1890
        %v1893 = vadd.f32 %v1886, %v1890
        %v1894 = vmax.f32 %v1892, 0.0
        %v1895 = vmax.f32 %v1893, 0.0
        %v1896 = vld [vmem:[#allocation10] sm:$0xff]
        %v1897 = vld [vmem:[#allocation10 + $0x8] sm:$0xff]
        %v1898 = vld [vmem:[#allocation10 + $0x10] sm:$0xff]
        %v1899 = vld [vmem:[#allocation10 + $0x18] sm:$0xff]
        %v1900 = vld [vmem:[#allocation10 + $0x20] sm:$0xff]
        %v1901 = vld [vmem:[#allocation10 + $0x28] sm:$0xff]
        %v1902 = vld [vmem:[#allocation10 + $0x30] sm:$0xff]
        %v1903 = vld [vmem:[#allocation10 + $0x38] sm:$0xff]
        %v1904 = vld [vmem:[#allocation10 + $0x40] sm:$0xff]
        %v1905 = vld [vmem:[#allocation10 + $0x48] sm:$0xff]
        %v1906 = vld [vmem:[#allocation10 + $0x50] sm:$0xff]
        %v1907 = vld [vmem:[#allocation10 + $0x58] sm:$0xff]
        %v1908 = vld [vmem:[#allocation10 + $0x60] sm:$0xff]
        %v1909 = vld [vmem:[#allocation10 + $0x68] sm:$0xff]
        %v1910 = vld [vmem:[#allocation10 + $0x70] sm:$0xff]
        %v1911 = vld [vmem:[#allocation10 + $0x78] sm:$0xff]
        %1912 = vmatpush.msra.mxu0 %v1911
        %1913 = vmatpush.msra.mxu0 %v1910
        %1914 = vmatpush.msra.mxu0 %v1909
        %1915 = vmatpush.msra.mxu0 %v1908
        %1916 = vmatpush.msra.mxu0 %v1907
        %1917 = vmatpush.msra.mxu0 %v1906
        %1918 = vmatpush.msra.mxu0 %v1905
        %1919 = vmatpush.msra.mxu0 %v1904
        %1920 = vmatpush.msra.mxu0 %v1903
        %1921 = vmatpush.msra.mxu0 %v1902
        %1922 = vmatpush.msra.mxu0 %v1901
        %1923 = vmatpush.msra.mxu0 %v1900
        %1924 = vmatpush.msra.mxu0 %v1899
        %1925 = vmatpush.msra.mxu0 %v1898
        %1926 = vmatpush.msra.mxu0 %v1897
        %1927 = vmatpush.msra.mxu0 %v1896
        %1928 = vmatmul.f32.gmra.mxu0 %v1894
        %v1929 = vpop.f32.mrf.mxu0
        %v1930 = vadd.f32 0.0, %v1929
        %1931 = vmatmul.f32.gmra.mxu0 %v1895
        %v1932 = vpop.f32.mrf.mxu0
        %v1933 = vadd.f32 0.0, %v1932
        %1934 = vdwg.mxu0
        %v1935 = vsub.f32 %v1894, %v1930
        %v1936 = vsub.f32 %v1895, %v1933
        %v1937 = vmul.f32 %v1935, %v1935
        %v1938 = vmul.f32 %v1936, %v1936
        %1939 = vmatpush.msra.mxu0 %v1911
        %1940 = vmatpush.msra.mxu0 %v1910
        %1941 = vmatpush.msra.mxu0 %v1909
        %1942 = vmatpush.msra.mxu0 %v1908
        %1943 = vmatpush.msra.mxu0 %v1907
        %1944 = vmatpush.msra.mxu0 %v1906
        %1945 = vmatpush.msra.mxu0 %v1905
        %1946 = vmatpush.msra.mxu0 %v1904
        %1947 = vmatpush.msra.mxu0 %v1903
        %1948 = vmatpush.msra.mxu0 %v1902
        %1949 = vmatpush.msra.mxu0 %v1901
        %1950 = vmatpush.msra.mxu0 %v1900
        %1951 = vmatpush.msra.mxu0 %v1899
        %1952 = vmatpush.msra.mxu0 %v1898
        %1953 = vmatpush.msra.mxu0 %v1897
        %1954 = vmatpush.msra.mxu0 %v1896
        %1955 = vmatmul.f32.gmra.mxu0 %v1937
        %v1956 = vpop.f32.mrf.mxu0
        %v1957 = vadd.f32 1e-05, %v1956
        %1958 = vmatmul.f32.gmra.mxu0 %v1938
        %v1959 = vpop.f32.mrf.mxu0
        %v1960 = vadd.f32 1e-05, %v1959
        %1961 = vdwg.mxu0
        %v1962 = vrsqrt.pop %v1957
        %v1963 = vmul.f32 %v1962, %v1957
        %v1964 = vmul.f32 %v1963, %v1962
        %v1965 = vmul.f32 0.5, %v1964
        %v1966 = vsub.f32 1.5, %v1965
        %v1967 = vmul.f32 %v1962, %v1966
        %vm1968 = vweird.f32 %v1957
        %vm1969 = vweird.f32 %v1962
        %vm1970 = vmor %vm1968, %vm1969
        %v1971 = vsel %vm1970, %v1962, %v1967
        %v1972 = vrsqrt.pop %v1960
        %v1973 = vmul.f32 %v1972, %v1960
        %v1974 = vmul.f32 %v1973, %v1972
        %v1975 = vmul.f32 0.5, %v1974
        %v1976 = vsub.f32 1.5, %v1975
        %v1977 = vmul.f32 %v1972, %v1976
        %vm1978 = vweird.f32 %v1960
        %vm1979 = vweird.f32 %v1972
        %vm1980 = vmor %vm1978, %vm1979
        %v1981 = vsel %vm1980, %v1972, %v1977
        %v1982 = vmul.f32 %v1935, %v1971
        %v1983 = vmul.f32 %v1936, %v1981
        %v1984 = vld [vmem:[%s450 + $0x2] sm:$0x1]
        %v1986 = vperm.slane %v1984, 0
        %v1988 = vmul.f32 %v1982, %v1986
        %v1989 = vmul.f32 %v1983, %v1986
        %v1990 = vld [vmem:[%s450 + $0x3] sm:$0x1]
        %v1992 = vperm.slane %v1990, 0
        %v1994 = vadd.f32 %v1988, %v1992
        %v1995 = vadd.f32 %v1989, %v1992
        %v1996 = vld [vmem:[%s440 + $0x8] sm:$0xff]
        %v1997 = vld [vmem:[%s440 + $0x18] sm:$0xff]
        %v1998 = vld [vmem:[%s440 + $0x28] sm:$0xff]
        %v1999 = vld [vmem:[%s440 + $0x38] sm:$0xff]
        %v2000 = vld [vmem:[%s440 + $0x48] sm:$0xff]
        %v2001 = vld [vmem:[%s440 + $0x58] sm:$0xff]
        %v2002 = vld [vmem:[%s440 + $0x68] sm:$0xff]
        %v2003 = vld [vmem:[%s440 + $0x78] sm:$0xff]
        %v2004 = vld [vmem:[%s440 + $0x88] sm:$0xff]
        %v2005 = vld [vmem:[%s440 + $0x98] sm:$0xff]
        %v2006 = vld [vmem:[%s440 + $0xa8] sm:$0xff]
        %v2007 = vld [vmem:[%s440 + $0xb8] sm:$0xff]
        %v2008 = vld [vmem:[%s440 + $0xc8] sm:$0xff]
        %v2009 = vld [vmem:[%s440 + $0xd8] sm:$0xff]
        %v2010 = vld [vmem:[%s440 + $0xe8] sm:$0xff]
        %v2011 = vld [vmem:[%s440 + $0xf8] sm:$0xff]
        %v2012 = vld [vmem:[%s450 + $0x4] sm:$0x1]
        %v2014 = vperm.slane %v2012, 0
        %2016 = vmatpush.msra.mxu0 %v2011
        %2017 = vmatpush.msra.mxu0 %v2010
        %2018 = vmatpush.msra.mxu0 %v2009
        %2019 = vmatpush.msra.mxu0 %v2008
        %2020 = vmatpush.msra.mxu0 %v2007
        %2021 = vmatpush.msra.mxu0 %v2006
        %2022 = vmatpush.msra.mxu0 %v2005
        %2023 = vmatpush.msra.mxu0 %v2004
        %2024 = vmatpush.msra.mxu0 %v2003
        %2025 = vmatpush.msra.mxu0 %v2002
        %2026 = vmatpush.msra.mxu0 %v2001
        %2027 = vmatpush.msra.mxu0 %v2000
        %2028 = vmatpush.msra.mxu0 %v1999
        %2029 = vmatpush.msra.mxu0 %v1998
        %2030 = vmatpush.msra.mxu0 %v1997
        %2031 = vmatpush.msra.mxu0 %v1996
        %2032 = vmatmul.f32.gmra.mxu0 %v1994
        %v2033 = vpop.f32.mrf.mxu0
        %v2034 = vadd.f32 %v2014, %v2033
        %2035 = vmatmul.f32.gmra.mxu0 %v1995
        %v2036 = vpop.f32.mrf.mxu0
        %v2037 = vadd.f32 %v2014, %v2036
        %2038 = vdwg.mxu0
        %s2039 = scalar_lea.vmem %s9, 16
        %v2040 = vld [vmem:[%s2039] sm:$0xff]
        %v2041 = vld [vmem:[%s2039 + $0x8] sm:$0xff]
        %v2042 = vld [vmem:[%s420 + $0x38] sm:$0xff]
        %v2043 = vld [vmem:[%s420 + $0x78] sm:$0xff]
        %v2044 = vmul.f32 %v2034, %v2042
        %v2045 = vmul.f32 %v2037, %v2043
        %v2046 = vadd.f32 %v2040, %v2044
        %v2047 = vadd.f32 %v2041, %v2045
        %2048 = vst.msk [vmem:[%s2039] sm:$0xff] %vm1283, %v2046
        %2049 = vst.msk [vmem:[%s2039 + $0x8] sm:$0xff] %vm1283, %v2047
        // Predicated region
        $region85: #{tpu_custom_call.1} parent=55 // pred_check
          %p2050 = pneg %p255
        $region86: #{tpu_custom_call.1} parent=55 // pred_check_branch
          %2052 = sbr.rel (%p2050) target = $region88
        $region87: #{tpu_custom_call.1} parent=55 // pred_region
          _
        $region88: #{tpu_custom_call.1} parent=55 // pred_fallthru
          _
        // Predicated region
        $region89: #{tpu_custom_call.1} parent=55 // pred_check
          %p2053 = pneg %p255
        $region90: #{tpu_custom_call.1} parent=55 // pred_check_branch
          %2055 = sbr.rel (%p2053) target = $region92
        $region91: #{tpu_custom_call.1} parent=55 // pred_region
          _
        $region92: #{tpu_custom_call.1} parent=55 // pred_fallthru
          _
      $region56: #{tpu_custom_call.1} parent=5 // pred_fallthru
        _
      %p2056 = scmp.le.s32.totalorder 2, %s23
      // Predicated region
      $region93: #{tpu_custom_call.1} parent=5 // pred_check
        %p2057 = pneg %p2056
      $region94: #{tpu_custom_call.1} parent=5 // pred_check_branch
        %2059 = sbr.rel (%p2057) target = $region96
      $region95: #{tpu_custom_call.1} parent=5 // pred_region
        %s2060 = ssub.s32 %s23, 2
      $region96: #{tpu_custom_call.1} parent=5 // pred_fallthru
        _
    $region6: #{tpu_custom_call.1} parent=1 // loop_footer
      %s27 = sadd.s32 1, %s23
    $region7: #{tpu_custom_call.1} parent=1 // loop_footer_branch
      %22 = sbr.rel target = $region3
    $region8: #{tpu_custom_call.1} parent=1 // loop_exit
      _
    %2061 = vsyncpa [#allocation3], 1
    %s2062 = scalar_lea.sflag [#allocation3], 1
    %2063 = vsyncpa %s2062, 1
    %2064 = vsyncpa [#allocation5], 1
    %s2065 = scalar_lea.sflag [#allocation5], 1
    %2066 = vsyncpa %s2065, 1
    %2067 = vsyncpa [#allocation8], 1
    %s2068 = scalar_lea.sflag [#allocation8], 1
    %2069 = vsyncpa %s2068, 1
    %2070 = vsyncpa [#allocation11], 1

</llo_original>
